<compile_context>
chip_gen: v7x
topology: tpu7x:2x2x1
jax: 0.10.0
libtpu: 0.0.40
codegen_flags: <defaults>
</compile_context>

<pallas_src>
import functools

import jax
import jax.numpy as jnp
from jax import lax
from jax.experimental import pallas as pl
from jax.experimental.pallas import tpu as pltpu
import numpy as np


# ----------------------------------------------------------------------------
# Static operator-matrix builders (host side, shape-dependent only).
# ----------------------------------------------------------------------------
def _round_up(x, m):
    return (x + m - 1) // m * m


def _upsample_matrix(n_in, n_out):
    """U s.t. U @ x == 1-D linear interpolation, align_corners=True."""
    U = np.zeros((n_out, n_in), np.float32)
    if n_in == 1:
        U[:, 0] = 1.0
        return U
    for i in range(n_out):
        pos = i * (n_in - 1) / (n_out - 1)
        lo = min(int(np.floor(pos)), n_in - 2)
        frac = pos - lo
        U[i, lo] += 1.0 - frac
        U[i, lo + 1] += frac
    return U


def _placement_matrix(W_src, C_src, c_off, w_off, W_dst, C_dst):
    """0/1 matrix scattering a flattened (w, c) row into the channel-concatenated,
    W-halo-padded conv1 input row: src lane w*C_src+c -> dst lane
    (w + 1 + w_off)*C_dst + c_off + c."""
    P = np.zeros((W_src * C_src, (W_dst + 2) * C_dst), np.float32)
    for w in range(W_src):
        for c in range(C_src):
            P[w * C_src + c, (w + 1 + w_off) * C_dst + c_off + c] = 1.0
    return P


def _band_matrices_f32(w_hwio, scale, W, out_padded):
    """Fold BN scale into the 3x3 conv weights, laid out as 3 banded matrices
    M[ky] of shape ((W+2)*Cin, S_out*Cout) so that with lane = w*C + c:
       out_row[h] = sum_ky padded_row[h-1+ky] @ M[ky]."""
    KH, KW, Cin, Cout = w_hwio.shape
    S_in = W + 2
    off = 1 if out_padded else 0
    S_out = W + 2 * off
    sel = np.zeros((S_in, S_out, KW), np.float32)            # pure 0/1 structure
    for w in range(W):
        for kx in range(KW):
            sel[w + kx, w + off, kx] = 1.0
    wf = w_hwio.astype(jnp.float32) * scale.astype(jnp.float32)[None, None, None, :]
    m = jnp.einsum("scx,kxio->ksico", jnp.asarray(sel), wf,
                   precision=lax.Precision.HIGHEST)
    return m.reshape(KH, S_in * Cin, S_out * Cout)            # f32


def _bias_row(bias, W, out_padded):
    row = jnp.tile(bias.astype(jnp.float32), W)[None, :]      # lane = w*C + c
    if out_padded:
        C = bias.shape[0]
        row = jnp.pad(row, ((0, 0), (C, C)))                  # halo lanes stay 0
    return row


def _shift_matrices(NB, H):
    """Per-image one-row shift operators on the stacked (NB*H) row space.
    dn[r] selects row r-1 (zero on each image's first row); up[r] selects r+1."""
    R = NB * H
    dn = np.zeros((R, R), np.float32)
    up = np.zeros((R, R), np.float32)
    for b in range(NB):
        base = b * H
        for h in range(H):
            if h >= 1:
                dn[base + h, base + h - 1] = 1.0
            if h <= H - 2:
                up[base + h, base + h + 1] = 1.0
    return dn, up


def fold_bn(gamma, beta, running_mean, running_var, eps=1e-5):
    scale = gamma / jnp.sqrt(running_var + eps)
    bias = beta - running_mean * scale
    return scale, bias


def _pick_batch_block(N, H, target_rows=128):
    """Largest divisor of N with NB*H <= target_rows, keeping >= 2 grid steps
    when N >= 2 (both v7x TensorCores get work)."""
    best = 1
    for nb in range(1, N + 1):
        if N % nb:
            continue
        if nb > 1 and nb * H > target_rows:
            continue
        if N >= 2 and N // nb < 2:
            continue
        best = nb
    return best


# ----------------------------------------------------------------------------
# The fused Pallas kernel: NB batch elements per grid step, everything 2-D.
# ----------------------------------------------------------------------------
def _up_fused_kernel(x1_ref, x2_ref, rmat_ref, smat_ref, wa_ref, wb_ref,
                     b1_ref, m2_ref, b2_ref, o_ref, *, cdt):
    f32 = jnp.float32
    x1 = x1_ref[...]                       # (NB*H1, W1*C1)   compute dtype
    x2 = x2_ref[...]                       # (NB*H,  W2*C2)   compute dtype

    # Per-image one-row shifts of x2 (0/1 matrices, exact in bf16;
    # image-boundary rows -> 0 == the conv's zero H-halo).
    x2_dn = jnp.dot(smat_ref[0], x2, preferred_element_type=f32).astype(cdt)
    x2_up = jnp.dot(smat_ref[1], x2, preferred_element_type=f32).astype(cdt)

    # Bilinear row (H-axis) interpolation of x1; the per-band row shift and the
    # F.pad y-placement are folded into the three row matrices, while the W-axis
    # interpolation / x-pad / channel concat are folded into wb (host side).
    xh0 = jnp.dot(rmat_ref[0], x1, preferred_element_type=f32).astype(cdt)
    xh1 = jnp.dot(rmat_ref[1], x1, preferred_element_type=f32).astype(cdt)
    xh2 = jnp.dot(rmat_ref[2], x1, preferred_element_type=f32).astype(cdt)

    # conv1 (3x3, pad=1, BN1 scale folded): 6 banded matmuls, f32 accumulation.
    acc1 = (jnp.dot(x2_dn, wa_ref[0], preferred_element_type=f32) +
            jnp.dot(x2,    wa_ref[1], preferred_element_type=f32) +
            jnp.dot(x2_up, wa_ref[2], preferred_element_type=f32) +
            jnp.dot(xh0,   wb_ref[0], preferred_element_type=f32) +
            jnp.dot(xh1,   wb_ref[1], preferred_element_type=f32) +
            jnp.dot(xh2,   wb_ref[2], preferred_element_type=f32))
    # f32 epilogue (v5e VPU-friendly); W-halo / lane-pad columns stay exactly 0.
    mid = jnp.maximum(acc1 + b1_ref[...], 0.0).astype(cdt)     # (NB*H, Lmid_p)

    # conv2 (3x3, pad=1, BN2 scale folded): shift rows, 3 banded matmuls.
    mid_dn = jnp.dot(smat_ref[0], mid, preferred_element_type=f32).astype(cdt)
    mid_up = jnp.dot(smat_ref[1], mid, preferred_element_type=f32).astype(cdt)
    acc2 = (jnp.dot(mid_dn, m2_ref[0], preferred_element_type=f32) +
            jnp.dot(mid,    m2_ref[1], preferred_element_type=f32) +
            jnp.dot(mid_up, m2_ref[2], preferred_element_type=f32))
    o_ref[...] = jnp.maximum(acc2 + b2_ref[...], 0.0).astype(o_ref.dtype)


# ----------------------------------------------------------------------------
# Wrapper: layout plumbing (NCHW <-> lane-dense rows) + static operator folding.
# ----------------------------------------------------------------------------
def up_forward(x1_nchw, x2_nchw, params, compute_dtype=jnp.bfloat16,
               batch_block=None):
    """Forward of `Up` (bilinear=True), eval-mode BN. NCHW in / NCHW f32 out."""
    N, C1, H1, W1 = x1_nchw.shape
    Nb, C2, H2, W2 = x2_nchw.shape
    assert N == Nb
    Cc = C1 + C2
    Cmid = params["w1"].shape[-1]
    Cout = params["w2"].shape[-1]
    assert params["w1"].shape[2] == Cc and params["w2"].shape[2] == Cmid
    H1u, W1u = 2 * H1, 2 * W1
    diffY, diffX = H2 - H1u, W2 - W1u
    # TODO(synk): negative F.pad (cropping) not supported.
    assert diffY >= 0 and diffX >= 0
    pad_t, pad_l = diffY // 2, diffX // 2

    NB = batch_block if batch_block is not None else _pick_batch_block(N, H2)
    assert N % NB == 0
    R = NB * H2

    f32 = jnp.float32
    cdt = compute_dtype

    # Layout plumbing: NCHW -> lane-dense row-stacked (N*H, W*C), cast once.
    # TODO(synk): expose a lane-dense NHWC entry point so chained decoder stages
    #             skip these transposes and the f32 HBM round-trip entirely.
    x1_rows = jnp.transpose(x1_nchw, (0, 2, 3, 1)).reshape(N * H1, W1 * C1).astype(cdt)
    x2_rows = jnp.transpose(x2_nchw, (0, 2, 3, 1)).reshape(N * H2, W2 * C2).astype(cdt)

    # --- fold BN + upsample-W + F.pad-x + channel-concat into conv matrices ---
    s1, b1 = fold_bn(*params["bn1"])
    s2, b2 = fold_bn(*params["bn2"])
    m1 = _band_matrices_f32(params["w1"], s1, W2, True)    # (3,(W2+2)*Cc,(W2+2)*Cmid)
    m2 = _band_matrices_f32(params["w2"], s2, W2, False)   # (3,(W2+2)*Cmid, W2*Cout)

    P2 = _placement_matrix(W2, C2, 0, 0, W2, Cc)
    P1 = _placement_matrix(W1u, C1, C2, pad_l, W2, Cc)
    UWE = np.kron(_upsample_matrix(W1, W1u).T, np.eye(C1, dtype=np.float32))
    UP1 = UWE @ P1

    Lmid = (W2 + 2) * Cmid
    Lmid_p = _round_up(Lmid, 128)                # lane-dense intermediate width
    Lout = W2 * Cout
    wa = jnp.einsum("ik,nkl->nil", jnp.asarray(P2), m1,
                    precision=lax.Precision.HIGHEST)
    wb = jnp.einsum("ik,nkl->nil", jnp.asarray(UP1), m1,
                    precision=lax.Precision.HIGHEST)
    wa = jnp.pad(wa, ((0, 0), (0, 0), (0, Lmid_p - Lmid))).astype(cdt)
    wb = jnp.pad(wb, ((0, 0), (0, 0), (0, Lmid_p - Lmid))).astype(cdt)
    m2p = jnp.pad(m2, ((0, 0), (0, Lmid_p - Lmid), (0, 0))).astype(cdt)
    b1row = jnp.pad(_bias_row(b1, W2, True), ((0, 0), (0, Lmid_p - Lmid)))   # f32
    b2row = _bias_row(b2, W2, False)                                          # f32

    # Row-space operators: bilinear H-interp (+ F.pad y placement) for x1, and
    # per-image one-row shifts implementing the 3x3 y-taps / zero H-halo.
    uh_pad = np.zeros((H2, H1), np.float32)
    uh_pad[pad_t:pad_t + H1u, :] = _upsample_matrix(H1, H1u)
    r1 = np.kron(np.eye(NB, dtype=np.float32), uh_pad)       # (R, NB*H1)
    sdn, sup = _shift_matrices(NB, H2)                        # (R, R)
    rmat = jnp.asarray(np.stack([sdn @ r1, r1, sup @ r1])).astype(cdt)
    smat = jnp.asarray(np.stack([sdn, sup])).astype(cdt)

    kernel = functools.partial(_up_fused_kernel, cdt=cdt)

    out_rows = pl.pallas_call(
        kernel,
        out_shape=jax.ShapeDtypeStruct((N * H2, Lout), f32),
        grid=(N // NB,),
        in_specs=[
            pl.BlockSpec((NB * H1, W1 * C1), lambda n: (n, 0)),
            pl.BlockSpec((R, W2 * C2), lambda n: (n, 0)),
            pl.BlockSpec(rmat.shape, lambda n: (0, 0, 0)),
            pl.BlockSpec(smat.shape, lambda n: (0, 0, 0)),
            pl.BlockSpec(wa.shape, lambda n: (0, 0, 0)),
            pl.BlockSpec(wb.shape, lambda n: (0, 0, 0)),
            pl.BlockSpec(b1row.shape, lambda n: (0, 0)),
            pl.BlockSpec(m2p.shape, lambda n: (0, 0, 0)),
            pl.BlockSpec(b2row.shape, lambda n: (0, 0)),
        ],
        out_specs=pl.BlockSpec((R, Lout), lambda n: (n, 0)),
        compiler_params=pltpu.CompilerParams(dimension_semantics=("parallel",)),
    )(x1_rows, x2_rows, rmat, smat, wa, wb, b1row, m2p, b2row)

    # Lane-dense rows -> NCHW to match the PyTorch output layout.
    return out_rows.reshape(N, H2, W2, Cout).transpose(0, 3, 1, 2)


# ----------------------------------------------------------------------------
# Pure-JAX reference (validation only), mirroring the kernel's operand rounding.
# ----------------------------------------------------------------------------
def _upsample2x_bilinear_ref(x):
    def interp(x, axis, n_in, n_out):
        if n_in == 1:
            return jnp.repeat(x, n_out, axis=axis)
        pos = jnp.arange(n_out, dtype=jnp.float32) * (n_in - 1) / (n_out - 1)
        lo = jnp.clip(jnp.floor(pos).astype(jnp.int32), 0, n_in - 2)
        w = pos - lo.astype(jnp.float32)
        a = jnp.take(x, lo, axis=axis)
        b = jnp.take(x, lo + 1, axis=axis)
        shape = [1] * x.ndim
        shape[axis] = n_out
        return a * (1.0 - w.reshape(shape)) + b * w.reshape(shape)

    N, H, W, C = x.shape
    return interp(interp(x, 1, H, 2 * H), 2, W, 2 * W)


def ref_up_forward(x1_nchw, x2_nchw, params, compute_dtype):
    f32 = jnp.float32
    rnd = lambda a: a.astype(compute_dtype).astype(f32)
    x1 = rnd(jnp.transpose(x1_nchw, (0, 2, 3, 1)).astype(f32))
    x2 = rnd(jnp.transpose(x2_nchw, (0, 2, 3, 1)).astype(f32))
    x1 = _upsample2x_bilinear_ref(x1)
    dY = x2.shape[1] - x1.shape[1]
    dX = x2.shape[2] - x1.shape[2]
    x1 = jnp.pad(x1, ((0, 0), (dY // 2, dY - dY // 2), (dX // 2, dX - dX // 2), (0, 0)))
    x = jnp.concatenate([x2, x1], axis=-1)

    s1, b1 = fold_bn(*params["bn1"])
    s2, b2 = fold_bn(*params["bn2"])
    w1f = rnd(params["w1"].astype(f32) * s1)
    w2f = rnd(params["w2"].astype(f32) * s2)

    def conv(a, w):
        return lax.conv_general_dilated(
            a, w, (1, 1), "SAME", dimension_numbers=("NHWC", "HWIO", "NHWC"),
            preferred_element_type=f32, precision=lax.Precision.HIGHEST)

    y = jnp.maximum(conv(rnd(x), w1f) + b1, 0.0)
    y = jnp.maximum(conv(rnd(y), w2f) + b2, 0.0)
    return jnp.transpose(y, (0, 3, 1, 2))


if __name__ == "__main__":
    # Up(in_channels=8, out_channels=8, bilinear=True)
    # => x1: (N, 4, 8, 8) deeper stage, x2: (N, 4, 16, 16) skip connection.
    in_channels, out_channels = 8, 8
    mid_channels = in_channels // 2
    N, H2, W2 = 2, 16, 16

    key = jax.random.PRNGKey(0)
    k = jax.random.split(key, 10)
    x1 = jax.random.normal(k[0], (N, in_channels // 2, H2 // 2, W2 // 2), jnp.float32)
    x2 = jax.random.normal(k[1], (N, in_channels // 2, H2, W2), jnp.float32)

    params = {
        # conv weights in HWIO (== PyTorch OIHW transposed to (ky, kx, ci, co))
        "w1": 0.1 * jax.random.normal(k[2], (3, 3, in_channels, mid_channels), jnp.float32),
        "w2": 0.1 * jax.random.normal(k[3], (3, 3, mid_channels, out_channels), jnp.float32),
        # BN params: (gamma, beta, running_mean, running_var)
        "bn1": (1.0 + 0.1 * jax.random.normal(k[4], (mid_channels,), jnp.float32),
                0.1 * jax.random.normal(k[5], (mid_channels,), jnp.float32),
                0.1 * jax.random.normal(k[6], (mid_channels,), jnp.float32),
                0.5 + jax.random.uniform(k[7], (mid_channels,), jnp.float32)),
        "bn2": (1.0 + 0.1 * jax.random.normal(k[8], (out_channels,), jnp.float32),
                0.1 * jax.random.normal(k[9], (out_channels,), jnp.float32),
                jnp.zeros((out_channels,), jnp.float32),
                jnp.ones((out_channels,), jnp.float32)),
    }

    ref_f32 = ref_up_forward(x1, x2, params, jnp.float32)

    # 1) f32 operands, one image per grid step (grid=(2,): both v7x TCs busy).
    out_f32 = jax.block_until_ready(up_forward(x1, x2, params, jnp.float32, batch_block=1))
    np.testing.assert_allclose(np.asarray(out_f32), np.asarray(ref_f32),
                               rtol=1e-3, atol=1e-3)

    # 2) f32 operands, both images fused into one grid step (fattened MXU M,
    #    exercises the NB>1 row-stacked path).
    out_f32_b2 = jax.block_until_ready(up_forward(x1, x2, params, jnp.float32, batch_block=2))
    np.testing.assert_allclose(np.asarray(out_f32_b2), np.asarray(ref_f32),
                               rtol=1e-3, atol=1e-3)

    # 3) bf16 operands (default fast path on v6e/v7x) vs a reference with the same
    #    operand rounding; slightly looser tolerance because the bilinear
    #    interpolation weights are folded into the bf16 conv matrices host-side.
    out_bf16 = jax.block_until_ready(up_forward(x1, x2, params))
    ref_bf16 = ref_up_forward(x1, x2, params, jnp.bfloat16)
    np.testing.assert_allclose(np.asarray(out_bf16), np.asarray(ref_bf16),
                               rtol=2.5e-2, atol=2.5e-2)

    assert out_bf16.shape == (N, out_channels, H2, W2)
    print("KERNEL_OK")
</pallas_src>

<mosaic_0001>
module attributes {stable_mosaic.version = 11 : i64} {
  func.func @_up_fused_kernel(%arg0: i32, %arg1: memref<8x32xf32, #tpu.memory_space<vmem>>, %arg2: memref<16x64xf32, #tpu.memory_space<vmem>>, %arg3: memref<3x16x8xf32, #tpu.memory_space<vmem>>, %arg4: memref<2x16x16xf32, #tpu.memory_space<vmem>>, %arg5: memref<3x64x128xf32, #tpu.memory_space<vmem>>, %arg6: memref<3x32x128xf32, #tpu.memory_space<vmem>>, %arg7: memref<1x128xf32, #tpu.memory_space<vmem>>, %arg8: memref<3x128x128xf32, #tpu.memory_space<vmem>>, %arg9: memref<1x128xf32, #tpu.memory_space<vmem>>, %arg10: memref<16x128xf32, #tpu.memory_space<vmem>>) attributes {dimension_semantics = [#tpu.dimension_semantics<parallel>], iteration_bounds = array<i64: 2>, scalar_prefetch = 0 : i64, scratch_operands = 0 : i64, tpu.core_type = #tpu.core_type<tc>, window_params = [{transform_indices = @transform_0, window_bounds = array<i64: 8, 32>}, {transform_indices = @transform_1, window_bounds = array<i64: 16, 64>}, {pipeline_mode = #tpu.pipeline_mode<synchronous>, transform_indices = @transform_2, window_bounds = array<i64: 3, 16, 8>}, {pipeline_mode = #tpu.pipeline_mode<synchronous>, transform_indices = @transform_3, window_bounds = array<i64: 2, 16, 16>}, {pipeline_mode = #tpu.pipeline_mode<synchronous>, transform_indices = @transform_4, window_bounds = array<i64: 3, 64, 128>}, {pipeline_mode = #tpu.pipeline_mode<synchronous>, transform_indices = @transform_5, window_bounds = array<i64: 3, 32, 128>}, {pipeline_mode = #tpu.pipeline_mode<synchronous>, transform_indices = @transform_6, window_bounds = array<i64: 1, 128>}, {pipeline_mode = #tpu.pipeline_mode<synchronous>, transform_indices = @transform_7, window_bounds = array<i64: 3, 128, 128>}, {pipeline_mode = #tpu.pipeline_mode<synchronous>, transform_indices = @transform_8, window_bounds = array<i64: 1, 128>}, {transform_indices = @transform_9, window_bounds = array<i64: 16, 128>}]} {
    %c0 = arith.constant 0 : index
    %c0_0 = arith.constant 0 : index
    %0 = vector.load %arg1[%c0, %c0_0] : memref<8x32xf32, #tpu.memory_space<vmem>>, vector<8x32xf32>
    %c0_1 = arith.constant 0 : index
    %c0_2 = arith.constant 0 : index
    %1 = vector.load %arg2[%c0_1, %c0_2] : memref<16x64xf32, #tpu.memory_space<vmem>>, vector<16x64xf32>
    %c0_3 = arith.constant 0 : index
    %c0_4 = arith.constant 0 : index
    %c0_5 = arith.constant 0 : index
    %2 = vector.load %arg4[%c0_3, %c0_4, %c0_5] : memref<2x16x16xf32, #tpu.memory_space<vmem>>, vector<1x16x16xf32>
    %3 = vector.shape_cast %2 : vector<1x16x16xf32> to vector<16x16xf32>
    %cst = arith.constant dense<0.000000e+00> : vector<16x64xf32>
    %4 = tpu.matmul %3, %1, %cst {dimension_numbers = #tpu.dot_dimension_numbers<[1], [0], [0], [1], [0, 0, 1, 1], [], []>} : vector<16x16xf32>, vector<16x64xf32>, vector<16x64xf32> -> vector<16x64xf32>
    %c1 = arith.constant 1 : index
    %c0_6 = arith.constant 0 : index
    %c0_7 = arith.constant 0 : index
    %5 = vector.load %arg4[%c1, %c0_6, %c0_7] : memref<2x16x16xf32, #tpu.memory_space<vmem>>, vector<1x16x16xf32>
    %6 = vector.shape_cast %5 : vector<1x16x16xf32> to vector<16x16xf32>
    %cst_8 = arith.constant dense<0.000000e+00> : vector<16x64xf32>
    %7 = tpu.matmul %6, %1, %cst_8 {dimension_numbers = #tpu.dot_dimension_numbers<[1], [0], [0], [1], [0, 0, 1, 1], [], []>} : vector<16x16xf32>, vector<16x64xf32>, vector<16x64xf32> -> vector<16x64xf32>
    %c0_9 = arith.constant 0 : index
    %c0_10 = arith.constant 0 : index
    %c0_11 = arith.constant 0 : index
    %8 = vector.load %arg3[%c0_9, %c0_10, %c0_11] : memref<3x16x8xf32, #tpu.memory_space<vmem>>, vector<1x16x8xf32>
    %9 = vector.shape_cast %8 : vector<1x16x8xf32> to vector<16x8xf32>
    %cst_12 = arith.constant dense<0.000000e+00> : vector<16x32xf32>
    %10 = tpu.matmul %9, %0, %cst_12 {dimension_numbers = #tpu.dot_dimension_numbers<[1], [0], [0], [1], [0, 0, 1, 1], [], []>} : vector<16x8xf32>, vector<8x32xf32>, vector<16x32xf32> -> vector<16x32xf32>
    %c1_13 = arith.constant 1 : index
    %c0_14 = arith.constant 0 : index
    %c0_15 = arith.constant 0 : index
    %11 = vector.load %arg3[%c1_13, %c0_14, %c0_15] : memref<3x16x8xf32, #tpu.memory_space<vmem>>, vector<1x16x8xf32>
    %12 = vector.shape_cast %11 : vector<1x16x8xf32> to vector<16x8xf32>
    %cst_16 = arith.constant dense<0.000000e+00> : vector<16x32xf32>
    %13 = tpu.matmul %12, %0, %cst_16 {dimension_numbers = #tpu.dot_dimension_numbers<[1], [0], [0], [1], [0, 0, 1, 1], [], []>} : vector<16x8xf32>, vector<8x32xf32>, vector<16x32xf32> -> vector<16x32xf32>
    %c2 = arith.constant 2 : index
    %c0_17 = arith.constant 0 : index
    %c0_18 = arith.constant 0 : index
    %14 = vector.load %arg3[%c2, %c0_17, %c0_18] : memref<3x16x8xf32, #tpu.memory_space<vmem>>, vector<1x16x8xf32>
    %15 = vector.shape_cast %14 : vector<1x16x8xf32> to vector<16x8xf32>
    %cst_19 = arith.constant dense<0.000000e+00> : vector<16x32xf32>
    %16 = tpu.matmul %15, %0, %cst_19 {dimension_numbers = #tpu.dot_dimension_numbers<[1], [0], [0], [1], [0, 0, 1, 1], [], []>} : vector<16x8xf32>, vector<8x32xf32>, vector<16x32xf32> -> vector<16x32xf32>
    %c0_20 = arith.constant 0 : index
    %c0_21 = arith.constant 0 : index
    %c0_22 = arith.constant 0 : index
    %17 = vector.load %arg5[%c0_20, %c0_21, %c0_22] : memref<3x64x128xf32, #tpu.memory_space<vmem>>, vector<1x64x128xf32>
    %18 = vector.shape_cast %17 : vector<1x64x128xf32> to vector<64x128xf32>
    %cst_23 = arith.constant dense<0.000000e+00> : vector<16x128xf32>
    %19 = tpu.matmul %4, %18, %cst_23 {dimension_numbers = #tpu.dot_dimension_numbers<[1], [0], [0], [1], [0, 0, 1, 1], [], []>} : vector<16x64xf32>, vector<64x128xf32>, vector<16x128xf32> -> vector<16x128xf32>
    %c1_24 = arith.constant 1 : index
    %c0_25 = arith.constant 0 : index
    %c0_26 = arith.constant 0 : index
    %20 = vector.load %arg5[%c1_24, %c0_25, %c0_26] : memref<3x64x128xf32, #tpu.memory_space<vmem>>, vector<1x64x128xf32>
    %21 = vector.shape_cast %20 : vector<1x64x128xf32> to vector<64x128xf32>
    %cst_27 = arith.constant dense<0.000000e+00> : vector<16x128xf32>
    %22 = tpu.matmul %1, %21, %cst_27 {dimension_numbers = #tpu.dot_dimension_numbers<[1], [0], [0], [1], [0, 0, 1, 1], [], []>} : vector<16x64xf32>, vector<64x128xf32>, vector<16x128xf32> -> vector<16x128xf32>
    %23 = arith.addf %19, %22 : vector<16x128xf32>
    %c2_28 = arith.constant 2 : index
    %c0_29 = arith.constant 0 : index
    %c0_30 = arith.constant 0 : index
    %24 = vector.load %arg5[%c2_28, %c0_29, %c0_30] : memref<3x64x128xf32, #tpu.memory_space<vmem>>, vector<1x64x128xf32>
    %25 = vector.shape_cast %24 : vector<1x64x128xf32> to vector<64x128xf32>
    %cst_31 = arith.constant dense<0.000000e+00> : vector<16x128xf32>
    %26 = tpu.matmul %7, %25, %cst_31 {dimension_numbers = #tpu.dot_dimension_numbers<[1], [0], [0], [1], [0, 0, 1, 1], [], []>} : vector<16x64xf32>, vector<64x128xf32>, vector<16x128xf32> -> vector<16x128xf32>
    %27 = arith.addf %23, %26 : vector<16x128xf32>
    %c0_32 = arith.constant 0 : index
    %c0_33 = arith.constant 0 : index
    %c0_34 = arith.constant 0 : index
    %28 = vector.load %arg6[%c0_32, %c0_33, %c0_34] : memref<3x32x128xf32, #tpu.memory_space<vmem>>, vector<1x32x128xf32>
    %29 = vector.shape_cast %28 : vector<1x32x128xf32> to vector<32x128xf32>
    %cst_35 = arith.constant dense<0.000000e+00> : vector<16x128xf32>
    %30 = tpu.matmul %10, %29, %cst_35 {dimension_numbers = #tpu.dot_dimension_numbers<[1], [0], [0], [1], [0, 0, 1, 1], [], []>} : vector<16x32xf32>, vector<32x128xf32>, vector<16x128xf32> -> vector<16x128xf32>
    %31 = arith.addf %27, %30 : vector<16x128xf32>
    %c1_36 = arith.constant 1 : index
    %c0_37 = arith.constant 0 : index
    %c0_38 = arith.constant 0 : index
    %32 = vector.load %arg6[%c1_36, %c0_37, %c0_38] : memref<3x32x128xf32, #tpu.memory_space<vmem>>, vector<1x32x128xf32>
    %33 = vector.shape_cast %32 : vector<1x32x128xf32> to vector<32x128xf32>
    %cst_39 = arith.constant dense<0.000000e+00> : vector<16x128xf32>
    %34 = tpu.matmul %13, %33, %cst_39 {dimension_numbers = #tpu.dot_dimension_numbers<[1], [0], [0], [1], [0, 0, 1, 1], [], []>} : vector<16x32xf32>, vector<32x128xf32>, vector<16x128xf32> -> vector<16x128xf32>
    %35 = arith.addf %31, %34 : vector<16x128xf32>
    %c2_40 = arith.constant 2 : index
    %c0_41 = arith.constant 0 : index
    %c0_42 = arith.constant 0 : index
    %36 = vector.load %arg6[%c2_40, %c0_41, %c0_42] : memref<3x32x128xf32, #tpu.memory_space<vmem>>, vector<1x32x128xf32>
    %37 = vector.shape_cast %36 : vector<1x32x128xf32> to vector<32x128xf32>
    %cst_43 = arith.constant dense<0.000000e+00> : vector<16x128xf32>
    %38 = tpu.matmul %16, %37, %cst_43 {dimension_numbers = #tpu.dot_dimension_numbers<[1], [0], [0], [1], [0, 0, 1, 1], [], []>} : vector<16x32xf32>, vector<32x128xf32>, vector<16x128xf32> -> vector<16x128xf32>
    %39 = arith.addf %35, %38 : vector<16x128xf32>
    %c0_44 = arith.constant 0 : index
    %c0_45 = arith.constant 0 : index
    %40 = vector.load %arg7[%c0_44, %c0_45] : memref<1x128xf32, #tpu.memory_space<vmem>>, vector<1x128xf32>
    %41 = vector.broadcast %40 : vector<1x128xf32> to vector<16x128xf32>
    %42 = arith.addf %39, %41 : vector<16x128xf32>
    %cst_46 = arith.constant 0.000000e+00 : f32
    %43 = vector.broadcast %cst_46 : f32 to vector<16x128xf32>
    %44 = arith.maximumf %42, %43 : vector<16x128xf32>
    %c0_47 = arith.constant 0 : index
    %c0_48 = arith.constant 0 : index
    %c0_49 = arith.constant 0 : index
    %45 = vector.load %arg4[%c0_47, %c0_48, %c0_49] : memref<2x16x16xf32, #tpu.memory_space<vmem>>, vector<1x16x16xf32>
    %46 = vector.shape_cast %45 : vector<1x16x16xf32> to vector<16x16xf32>
    %cst_50 = arith.constant dense<0.000000e+00> : vector<16x128xf32>
    %47 = tpu.matmul %46, %44, %cst_50 {dimension_numbers = #tpu.dot_dimension_numbers<[1], [0], [0], [1], [0, 0, 1, 1], [], []>} : vector<16x16xf32>, vector<16x128xf32>, vector<16x128xf32> -> vector<16x128xf32>
    %c1_51 = arith.constant 1 : index
    %c0_52 = arith.constant 0 : index
    %c0_53 = arith.constant 0 : index
    %48 = vector.load %arg4[%c1_51, %c0_52, %c0_53] : memref<2x16x16xf32, #tpu.memory_space<vmem>>, vector<1x16x16xf32>
    %49 = vector.shape_cast %48 : vector<1x16x16xf32> to vector<16x16xf32>
    %cst_54 = arith.constant dense<0.000000e+00> : vector<16x128xf32>
    %50 = tpu.matmul %49, %44, %cst_54 {dimension_numbers = #tpu.dot_dimension_numbers<[1], [0], [0], [1], [0, 0, 1, 1], [], []>} : vector<16x16xf32>, vector<16x128xf32>, vector<16x128xf32> -> vector<16x128xf32>
    %c0_55 = arith.constant 0 : index
    %c0_56 = arith.constant 0 : index
    %c0_57 = arith.constant 0 : index
    %51 = vector.load %arg8[%c0_55, %c0_56, %c0_57] : memref<3x128x128xf32, #tpu.memory_space<vmem>>, vector<1x128x128xf32>
    %52 = vector.shape_cast %51 : vector<1x128x128xf32> to vector<128x128xf32>
    %cst_58 = arith.constant dense<0.000000e+00> : vector<16x128xf32>
    %53 = tpu.matmul %47, %52, %cst_58 {dimension_numbers = #tpu.dot_dimension_numbers<[1], [0], [0], [1], [0, 0, 1, 1], [], []>} : vector<16x128xf32>, vector<128x128xf32>, vector<16x128xf32> -> vector<16x128xf32>
    %c1_59 = arith.constant 1 : index
    %c0_60 = arith.constant 0 : index
    %c0_61 = arith.constant 0 : index
    %54 = vector.load %arg8[%c1_59, %c0_60, %c0_61] : memref<3x128x128xf32, #tpu.memory_space<vmem>>, vector<1x128x128xf32>
    %55 = vector.shape_cast %54 : vector<1x128x128xf32> to vector<128x128xf32>
    %cst_62 = arith.constant dense<0.000000e+00> : vector<16x128xf32>
    %56 = tpu.matmul %44, %55, %cst_62 {dimension_numbers = #tpu.dot_dimension_numbers<[1], [0], [0], [1], [0, 0, 1, 1], [], []>} : vector<16x128xf32>, vector<128x128xf32>, vector<16x128xf32> -> vector<16x128xf32>
    %57 = arith.addf %53, %56 : vector<16x128xf32>
    %c2_63 = arith.constant 2 : index
    %c0_64 = arith.constant 0 : index
    %c0_65 = arith.constant 0 : index
    %58 = vector.load %arg8[%c2_63, %c0_64, %c0_65] : memref<3x128x128xf32, #tpu.memory_space<vmem>>, vector<1x128x128xf32>
    %59 = vector.shape_cast %58 : vector<1x128x128xf32> to vector<128x128xf32>
    %cst_66 = arith.constant dense<0.000000e+00> : vector<16x128xf32>
    %60 = tpu.matmul %50, %59, %cst_66 {dimension_numbers = #tpu.dot_dimension_numbers<[1], [0], [0], [1], [0, 0, 1, 1], [], []>} : vector<16x128xf32>, vector<128x128xf32>, vector<16x128xf32> -> vector<16x128xf32>
    %61 = arith.addf %57, %60 : vector<16x128xf32>
    %c0_67 = arith.constant 0 : index
    %c0_68 = arith.constant 0 : index
    %62 = vector.load %arg9[%c0_67, %c0_68] : memref<1x128xf32, #tpu.memory_space<vmem>>, vector<1x128xf32>
    %63 = vector.broadcast %62 : vector<1x128xf32> to vector<16x128xf32>
    %64 = arith.addf %61, %63 : vector<16x128xf32>
    %cst_69 = arith.constant 0.000000e+00 : f32
    %65 = vector.broadcast %cst_69 : f32 to vector<16x128xf32>
    %66 = arith.maximumf %64, %65 : vector<16x128xf32>
    %c0_70 = arith.constant 0 : index
    %c0_71 = arith.constant 0 : index
    %67 = vector.load %arg10[%c0_70, %c0_71] : memref<16x128xf32, #tpu.memory_space<vmem>>, vector<16x128xf32>
    tpu.vector_store %arg10[%c0_70, %c0_71], %66 {strides = array<i32>} : memref<16x128xf32, #tpu.memory_space<vmem>>, vector<16x128xf32>,
    return
  }
  func.func @transform_0(%arg0: i32) -> (i32, i32) {
    %c0_i32 = arith.constant 0 : i32
    %c0_i32_0 = arith.constant 0 : i32
    return %arg0, %c0_i32 : i32, i32
  }
  func.func @transform_1(%arg0: i32) -> (i32, i32) {
    %c0_i32 = arith.constant 0 : i32
    %c0_i32_0 = arith.constant 0 : i32
    return %arg0, %c0_i32 : i32, i32
  }
  func.func @transform_2(%arg0: i32) -> (i32, i32, i32) {
    %c0_i32 = arith.constant 0 : i32
    %c0_i32_0 = arith.constant 0 : i32
    %c0_i32_1 = arith.constant 0 : i32
    %c0_i32_2 = arith.constant 0 : i32
    return %c0_i32, %c0_i32_0, %c0_i32_1 : i32, i32, i32
  }
  func.func @transform_3(%arg0: i32) -> (i32, i32, i32) {
    %c0_i32 = arith.constant 0 : i32
    %c0_i32_0 = arith.constant 0 : i32
    %c0_i32_1 = arith.constant 0 : i32
    %c0_i32_2 = arith.constant 0 : i32
    return %c0_i32, %c0_i32_0, %c0_i32_1 : i32, i32, i32
  }
  func.func @transform_4(%arg0: i32) -> (i32, i32, i32) {
    %c0_i32 = arith.constant 0 : i32
    %c0_i32_0 = arith.constant 0 : i32
    %c0_i32_1 = arith.constant 0 : i32
    %c0_i32_2 = arith.constant 0 : i32
    return %c0_i32, %c0_i32_0, %c0_i32_1 : i32, i32, i32
  }
  func.func @transform_5(%arg0: i32) -> (i32, i32, i32) {
    %c0_i32 = arith.constant 0 : i32
    %c0_i32_0 = arith.constant 0 : i32
    %c0_i32_1 = arith.constant 0 : i32
    %c0_i32_2 = arith.constant 0 : i32
    return %c0_i32, %c0_i32_0, %c0_i32_1 : i32, i32, i32
  }
  func.func @transform_6(%arg0: i32) -> (i32, i32) {
    %c0_i32 = arith.constant 0 : i32
    %c0_i32_0 = arith.constant 0 : i32
    %c0_i32_1 = arith.constant 0 : i32
    return %c0_i32, %c0_i32_0 : i32, i32
  }
  func.func @transform_7(%arg0: i32) -> (i32, i32, i32) {
    %c0_i32 = arith.constant 0 : i32
    %c0_i32_0 = arith.constant 0 : i32
    %c0_i32_1 = arith.constant 0 : i32
    %c0_i32_2 = arith.constant 0 : i32
    return %c0_i32, %c0_i32_0, %c0_i32_1 : i32, i32, i32
  }
  func.func @transform_8(%arg0: i32) -> (i32, i32) {
    %c0_i32 = arith.constant 0 : i32
    %c0_i32_0 = arith.constant 0 : i32
    %c0_i32_1 = arith.constant 0 : i32
    return %c0_i32, %c0_i32_0 : i32, i32
  }
  func.func @transform_9(%arg0: i32) -> (i32, i32) {
    %c0_i32 = arith.constant 0 : i32
    %c0_i32_0 = arith.constant 0 : i32
    return %arg0, %c0_i32 : i32, i32
  }
}

</mosaic_0001>

<llo_original>
// kernel: tpu_custom_call.1
$region0: #{tpu_custom_call.1}
  #allocation0 [shape = 'u32[]', space=smem, size = 0x4, offset = 0x4, fixed_abs, tag = 'smem constant byte address 0x4 - core index']
  #allocation1 [shape = 'u32[144,128]{1,0:T(1,128)}', space=vmem, size = 0x12000, scoped, tag = 'internal scratch']
  %s0 = inlined_call_operand.hbm [shape: f32[16,32], index: 0, kind: input, shape index: {}]
  %s1 = inlined_call_operand.vmem [shape: f32[32,64], index: 1, kind: input, shape index: {}]
  %s2 = inlined_call_operand.vmem [shape: f32[3,16,8], index: 2, kind: input, shape index: {}]
  %s3 = inlined_call_operand.vmem [shape: f32[2,16,16], index: 3, kind: input, shape index: {}]
  %s4 = inlined_call_operand.hbm [shape: f32[3,64,128], index: 4, kind: input, shape index: {}]
  %s5 = inlined_call_operand.hbm [shape: f32[3,32,128], index: 5, kind: input, shape index: {}]
  %s6 = inlined_call_operand.vmem [shape: f32[1,128], index: 6, kind: input, shape index: {}]
  %s7 = inlined_call_operand.hbm [shape: f32[3,128,128], index: 7, kind: input, shape index: {}]
  %s8 = inlined_call_operand.vmem [shape: f32[1,128], index: 8, kind: input, shape index: {}]
  %s9 = inlined_call_operand.hbm [shape: f32[32,128], index: 9, kind: output, shape index: {}]
  %s10 = sld [smem:[#allocation0]]
  $region85: #{tpu_custom_call.1} parent=0
    _
  %s12 = ssub.s32 1, %s10
  %s13 = scalar_select 0, %s12, %s10
  $region1: #{tpu_custom_call.1} parent=0
    #allocation2 [shape = 'u8[8192]{0}', space=vmem, size = 0x2000, scoped, tag = 'input window, operand 0']
    #allocation3 [shape = 's32[2]{0}', space=sflag, size = 0x8, scoped, tag = 'scoped memory for tpu_custom_call.1']
    #allocation4 [shape = 's32[2]{0}', space=sflag, size = 0x8, scoped, tag = 'scoped memory for tpu_custom_call.1']
    #allocation5 [shape = 'u8[98304]{0}', space=vmem, size = 0x18000, scoped, tag = 'input window, operand 4, single buffered']
    #allocation6 [shape = 's32[1]{0}', space=sflag, size = 0x4, scoped, tag = 'scoped memory for tpu_custom_call.1']
    #allocation7 [shape = 'u8[49152]{0}', space=vmem, size = 0xc000, scoped, tag = 'input window, operand 5, single buffered']
    #allocation8 [shape = 'u8[196608]{0}', space=vmem, size = 0x30000, scoped, tag = 'input window, operand 7, single buffered']
    #allocation9 [shape = 's32[1]{0}', space=sflag, size = 0x4, scoped, tag = 'scoped memory for tpu_custom_call.1']
    #allocation10 [shape = 'u8[16384]{0}', space=vmem, size = 0x4000, scoped, tag = 'output window, operand 0']
    %14 = vsyncpa [#allocation3], 0
    %s15 = scalar_lea.sflag [#allocation3], 1
    %16 = vsyncpa %s15, 0
    %17 = vsyncpa [#allocation6], 0
    %18 = vsyncpa [#allocation9], 0
    %19 = vsyncpa [#allocation4], 0
    %s20 = scalar_lea.sflag [#allocation4], 1
    %21 = vsyncpa %s20, 0
    loop: start=0, step=1, limit=4
    $region2: #{tpu_custom_call.1} parent=1 // loop_pre_header
      _
    $region3: #{tpu_custom_call.1} parent=1 // loop_header
      %s23 = sphi 0, %s27
      %p24 = scmp.ge.s32.totalorder %s23, 4
      %s33 = sphi 0, %s35
      %s36 = sphi 0, %s33
      %s37 = sphi 0, %s36
      %s53 = sphi 0, %s37
      %s59 = sphi 0, %s61
      %s62 = sphi 0, %s59
      %s63 = sphi 0, %s62
      %s79 = sphi 0, %s63
      %s83 = sphi 0, %s83
      %s85 = sphi 0, %s83
      %s86 = sphi 0, %s85
      %s100 = sphi 0, %s86
      %s104 = sphi 0, %s104
      %s106 = sphi 0, %s104
      %s107 = sphi 0, %s106
      %s121 = sphi 0, %s107
      %s125 = sphi 0, %s125
      %s127 = sphi 0, %s125
      %s128 = sphi 0, %s127
      %s142 = sphi 0, %s128
      %s146 = sphi 0, %s146
      %s148 = sphi 0, %s146
      %s149 = sphi 0, %s148
      %s163 = sphi 0, %s149
      %s167 = sphi 0, %s167
      %s169 = sphi 0, %s167
      %s170 = sphi 0, %s169
      %s184 = sphi 0, %s170
      %s188 = sphi 0, %s188
      %s190 = sphi 0, %s188
      %s191 = sphi 0, %s190
      %s205 = sphi 0, %s191
      %s209 = sphi 0, %s209
      %s211 = sphi 0, %s209
      %s212 = sphi 0, %s211
      %s226 = sphi 0, %s212
      %s232 = sphi 0, %s234
      %s235 = sphi 0, %s232
      %s236 = sphi 0, %s235
      %s252 = sphi 0, %s236
    $region4: #{tpu_custom_call.1} parent=1 // loop_header_branch
      %26 = sbr.rel (%p24) target = $region8
    $region5: #{tpu_custom_call.1} parent=1 // loop_body
      %s28 = ssub.s32 %s23, 1
      %s29 = ssub.s32 %s23, 2
      %s30 = sadd.s32 %s23, 1
      %s31 = ssub.s32 %s23, %s30
      %p32 = scmp.eq.s32.totalorder %s31, 0
      %s34 = sadd.s32 %s33, 1
      %s35 = scalar_select %p32, %s33, %s34
      %p38 = pneg %p32
      %p39 = scmp.eq.s32.totalorder %s23, 1
      %p40 = por %p38, %p39
      %p41 = scmp.ne.s32.totalorder %s33, %s36
      %p42 = scmp.eq.s32.totalorder %s23, 0
      %p43 = por %p41, %p42
      %p44 = scmp.ne.s32.totalorder %s33, %s36
      %p45 = scmp.eq.s32.totalorder %s28, 1
      %p46 = por %p44, %p45
      %p47 = scmp.ne.s32.totalorder %s36, %s37
      %p48 = scmp.eq.s32.totalorder %s28, 0
      %p49 = por %p47, %p48
      %p50 = scmp.ne.s32.totalorder %s36, %s37
      %p51 = scmp.eq.s32.totalorder %s29, 1
      %p52 = por %p50, %p51
      %p54 = scmp.ne.s32.totalorder %s37, %s53
      %p55 = scmp.eq.s32.totalorder %s29, 0
      %p56 = por %p54, %p55
      %s57 = ssub.s32 %s23, %s30
      %p58 = scmp.eq.s32.totalorder %s57, 0
      %s60 = sadd.s32 %s59, 1
      %s61 = scalar_select %p58, %s59, %s60
      %p64 = pneg %p58
      %p65 = scmp.eq.s32.totalorder %s23, 1
      %p66 = por %p64, %p65
      %p67 = scmp.ne.s32.totalorder %s59, %s62
      %p68 = scmp.eq.s32.totalorder %s23, 0
      %p69 = por %p67, %p68
      %p70 = scmp.ne.s32.totalorder %s59, %s62
      %p71 = scmp.eq.s32.totalorder %s28, 1
      %p72 = por %p70, %p71
      %p73 = scmp.ne.s32.totalorder %s62, %s63
      %p74 = scmp.eq.s32.totalorder %s28, 0
      %p75 = por %p73, %p74
      %p76 = scmp.ne.s32.totalorder %s62, %s63
      %p77 = scmp.eq.s32.totalorder %s29, 1
      %p78 = por %p76, %p77
      %p80 = scmp.ne.s32.totalorder %s63, %s79
      %p81 = scmp.eq.s32.totalorder %s29, 0
      %p82 = por %p80, %p81
      %s84 = sadd.s32 %s83, 1
      %p87 = scmp.eq.s32.totalorder %s23, 1
      %p88 = scmp.ne.s32.totalorder %s83, %s85
      %p89 = scmp.eq.s32.totalorder %s23, 0
      %p90 = por %p88, %p89
      %p91 = scmp.ne.s32.totalorder %s83, %s85
      %p92 = scmp.eq.s32.totalorder %s28, 1
      %p93 = por %p91, %p92
      %p94 = scmp.ne.s32.totalorder %s85, %s86
      %p95 = scmp.eq.s32.totalorder %s28, 0
      %p96 = por %p94, %p95
      %p97 = scmp.ne.s32.totalorder %s85, %s86
      %p98 = scmp.eq.s32.totalorder %s29, 1
      %p99 = por %p97, %p98
      %p101 = scmp.ne.s32.totalorder %s86, %s100
      %p102 = scmp.eq.s32.totalorder %s29, 0
      %p103 = por %p101, %p102
      %s105 = sadd.s32 %s104, 1
      %p108 = scmp.eq.s32.totalorder %s23, 1
      %p109 = scmp.ne.s32.totalorder %s104, %s106
      %p110 = scmp.eq.s32.totalorder %s23, 0
      %p111 = por %p109, %p110
      %p112 = scmp.ne.s32.totalorder %s104, %s106
      %p113 = scmp.eq.s32.totalorder %s28, 1
      %p114 = por %p112, %p113
      %p115 = scmp.ne.s32.totalorder %s106, %s107
      %p116 = scmp.eq.s32.totalorder %s28, 0
      %p117 = por %p115, %p116
      %p118 = scmp.ne.s32.totalorder %s106, %s107
      %p119 = scmp.eq.s32.totalorder %s29, 1
      %p120 = por %p118, %p119
      %p122 = scmp.ne.s32.totalorder %s107, %s121
      %p123 = scmp.eq.s32.totalorder %s29, 0
      %p124 = por %p122, %p123
      %s126 = sadd.s32 %s125, 1
      %p129 = scmp.eq.s32.totalorder %s23, 1
      %p130 = scmp.ne.s32.totalorder %s125, %s127
      %p131 = scmp.eq.s32.totalorder %s23, 0
      %p132 = por %p130, %p131
      %p133 = scmp.ne.s32.totalorder %s125, %s127
      %p134 = scmp.eq.s32.totalorder %s28, 1
      %p135 = por %p133, %p134
      %p136 = scmp.ne.s32.totalorder %s127, %s128
      %p137 = scmp.eq.s32.totalorder %s28, 0
      %p138 = por %p136, %p137
      %p139 = scmp.ne.s32.totalorder %s127, %s128
      %p140 = scmp.eq.s32.totalorder %s29, 1
      %p141 = por %p139, %p140
      %p143 = scmp.ne.s32.totalorder %s128, %s142
      %p144 = scmp.eq.s32.totalorder %s29, 0
      %p145 = por %p143, %p144
      %s147 = sadd.s32 %s146, 1
      %p150 = scmp.eq.s32.totalorder %s23, 1
      %p151 = scmp.ne.s32.totalorder %s146, %s148
      %p152 = scmp.eq.s32.totalorder %s23, 0
      %p153 = por %p151, %p152
      %p154 = scmp.ne.s32.totalorder %s146, %s148
      %p155 = scmp.eq.s32.totalorder %s28, 1
      %p156 = por %p154, %p155
      %p157 = scmp.ne.s32.totalorder %s148, %s149
      %p158 = scmp.eq.s32.totalorder %s28, 0
      %p159 = por %p157, %p158
      %p160 = scmp.ne.s32.totalorder %s148, %s149
      %p161 = scmp.eq.s32.totalorder %s29, 1
      %p162 = por %p160, %p161
      %p164 = scmp.ne.s32.totalorder %s149, %s163
      %p165 = scmp.eq.s32.totalorder %s29, 0
      %p166 = por %p164, %p165
      %s168 = sadd.s32 %s167, 1
      %p171 = scmp.eq.s32.totalorder %s23, 1
      %p172 = scmp.ne.s32.totalorder %s167, %s169
      %p173 = scmp.eq.s32.totalorder %s23, 0
      %p174 = por %p172, %p173
      %p175 = scmp.ne.s32.totalorder %s167, %s169
      %p176 = scmp.eq.s32.totalorder %s28, 1
      %p177 = por %p175, %p176
      %p178 = scmp.ne.s32.totalorder %s169, %s170
      %p179 = scmp.eq.s32.totalorder %s28, 0
      %p180 = por %p178, %p179
      %p181 = scmp.ne.s32.totalorder %s169, %s170
      %p182 = scmp.eq.s32.totalorder %s29, 1
      %p183 = por %p181, %p182
      %p185 = scmp.ne.s32.totalorder %s170, %s184
      %p186 = scmp.eq.s32.totalorder %s29, 0
      %p187 = por %p185, %p186
      %s189 = sadd.s32 %s188, 1
      %p192 = scmp.eq.s32.totalorder %s23, 1
      %p193 = scmp.ne.s32.totalorder %s188, %s190
      %p194 = scmp.eq.s32.totalorder %s23, 0
      %p195 = por %p193, %p194
      %p196 = scmp.ne.s32.totalorder %s188, %s190
      %p197 = scmp.eq.s32.totalorder %s28, 1
      %p198 = por %p196, %p197
      %p199 = scmp.ne.s32.totalorder %s190, %s191
      %p200 = scmp.eq.s32.totalorder %s28, 0
      %p201 = por %p199, %p200
      %p202 = scmp.ne.s32.totalorder %s190, %s191
      %p203 = scmp.eq.s32.totalorder %s29, 1
      %p204 = por %p202, %p203
      %p206 = scmp.ne.s32.totalorder %s191, %s205
      %p207 = scmp.eq.s32.totalorder %s29, 0
      %p208 = por %p206, %p207
      %s210 = sadd.s32 %s209, 1
      %p213 = scmp.eq.s32.totalorder %s23, 1
      %p214 = scmp.ne.s32.totalorder %s209, %s211
      %p215 = scmp.eq.s32.totalorder %s23, 0
      %p216 = por %p214, %p215
      %p217 = scmp.ne.s32.totalorder %s209, %s211
      %p218 = scmp.eq.s32.totalorder %s28, 1
      %p219 = por %p217, %p218
      %p220 = scmp.ne.s32.totalorder %s211, %s212
      %p221 = scmp.eq.s32.totalorder %s28, 0
      %p222 = por %p220, %p221
      %p223 = scmp.ne.s32.totalorder %s211, %s212
      %p224 = scmp.eq.s32.totalorder %s29, 1
      %p225 = por %p223, %p224
      %p227 = scmp.ne.s32.totalorder %s212, %s226
      %p228 = scmp.eq.s32.totalorder %s29, 0
      %p229 = por %p227, %p228
      %s230 = ssub.s32 %s23, %s30
      %p231 = scmp.eq.s32.totalorder %s230, 0
      %s233 = sadd.s32 %s232, 1
      %s234 = scalar_select %p231, %s232, %s233
      %p237 = pneg %p231
      %p238 = scmp.eq.s32.totalorder %s23, 1
      %p239 = por %p237, %p238
      %p240 = scmp.ne.s32.totalorder %s232, %s235
      %p241 = scmp.eq.s32.totalorder %s23, 0
      %p242 = por %p240, %p241
      %p243 = scmp.ne.s32.totalorder %s232, %s235
      %p244 = scmp.eq.s32.totalorder %s28, 1
      %p245 = por %p243, %p244
      %p246 = scmp.ne.s32.totalorder %s235, %s236
      %p247 = scmp.eq.s32.totalorder %s28, 0
      %p248 = por %p246, %p247
      %p249 = scmp.ne.s32.totalorder %s235, %s236
      %p250 = scmp.eq.s32.totalorder %s29, 1
      %p251 = por %p249, %p250
      %p253 = scmp.ne.s32.totalorder %s236, %s252
      %p254 = scmp.eq.s32.totalorder %s29, 0
      %p255 = por %p253, %p254
      %p256 = scmp.le.s32.totalorder 1, %s23
      %p257 = scmp.lt.s32.totalorder %s23, 3
      %p258 = pnand %p256, %p257
      %p259 = pneg %p258
      // Predicated region
      $region9: #{tpu_custom_call.1} parent=5 // pred_check
        _
      $region10: #{tpu_custom_call.1} parent=5 // pred_check_branch
        %261 = sbr.rel (%p258) target = $region12
      $region11: #{tpu_custom_call.1} parent=5 // pred_region
        %s262 = ssub.s32 %s23, 1
        // Predicated region
        $region13: #{tpu_custom_call.1} parent=11 // pred_check
          %p263 = pneg %p96
        $region14: #{tpu_custom_call.1} parent=11 // pred_check_branch
          %265 = sbr.rel (%p263) target = $region16
        $region15: #{tpu_custom_call.1} parent=11 // pred_region
          _
        $region16: #{tpu_custom_call.1} parent=11 // pred_fallthru
          _
        // Predicated region
        $region17: #{tpu_custom_call.1} parent=11 // pred_check
          %p266 = pneg %p117
        $region18: #{tpu_custom_call.1} parent=11 // pred_check_branch
          %268 = sbr.rel (%p266) target = $region20
        $region19: #{tpu_custom_call.1} parent=11 // pred_region
          _
        $region20: #{tpu_custom_call.1} parent=11 // pred_fallthru
          _
        // Predicated region
        $region21: #{tpu_custom_call.1} parent=11 // pred_check
          %p269 = pneg %p138
        $region22: #{tpu_custom_call.1} parent=11 // pred_check_branch
          %271 = sbr.rel (%p269) target = $region24
        $region23: #{tpu_custom_call.1} parent=11 // pred_region
          %s273 = ssub.s32 3072, 3072
          %274 = vsyncadd [#allocation6], %s273
          %s275 = sshll.u32 [#allocation5], 4
          %s276 = int_to_ptr.vmem [resolvable:$true] %s275
          %281 = dma.hbm_to_vmem [thread:$0]  %s4, 3072, %s276, [#allocation6], 128, 128, 8
        $region24: #{tpu_custom_call.1} parent=11 // pred_fallthru
          _
        // Predicated region
        $region25: #{tpu_custom_call.1} parent=11 // pred_check
          %p282 = pneg %p159
        $region26: #{tpu_custom_call.1} parent=11 // pred_check_branch
          %284 = sbr.rel (%p282) target = $region28
        $region27: #{tpu_custom_call.1} parent=11 // pred_region
          %s286 = ssub.s32 1536, 1536
          %287 = vsyncadd [#allocation6], %s286
          %s288 = sshll.u32 [#allocation7], 4
          %s289 = int_to_ptr.vmem [resolvable:$true] %s288
          %294 = dma.hbm_to_vmem [thread:$0]  %s5, 1536, %s289, [#allocation6], 128, 128, 8
        $region28: #{tpu_custom_call.1} parent=11 // pred_fallthru
          _
        // Predicated region
        $region29: #{tpu_custom_call.1} parent=11 // pred_check
          %p295 = pneg %p180
        $region30: #{tpu_custom_call.1} parent=11 // pred_check_branch
          %297 = sbr.rel (%p295) target = $region32
        $region31: #{tpu_custom_call.1} parent=11 // pred_region
          _
        $region32: #{tpu_custom_call.1} parent=11 // pred_fallthru
          _
        // Predicated region
        $region33: #{tpu_custom_call.1} parent=11 // pred_check
          %p298 = pneg %p201
        $region34: #{tpu_custom_call.1} parent=11 // pred_check_branch
          %300 = sbr.rel (%p298) target = $region36
        $region35: #{tpu_custom_call.1} parent=11 // pred_region
          %s302 = ssub.s32 6144, 6144
          %303 = vsyncadd [#allocation9], %s302
          %s304 = sshll.u32 [#allocation8], 4
          %s305 = int_to_ptr.vmem [resolvable:$true] %s304
          %310 = dma.hbm_to_vmem [thread:$0]  %s7, 6144, %s305, [#allocation9], 128, 128, 8
        $region36: #{tpu_custom_call.1} parent=11 // pred_fallthru
          _
        // Predicated region
        $region37: #{tpu_custom_call.1} parent=11 // pred_check
          %p311 = pneg %p222
        $region38: #{tpu_custom_call.1} parent=11 // pred_check_branch
          %313 = sbr.rel (%p311) target = $region40
        $region39: #{tpu_custom_call.1} parent=11 // pred_region
          _
        $region40: #{tpu_custom_call.1} parent=11 // pred_fallthru
          _
      $region12: #{tpu_custom_call.1} parent=5 // pred_fallthru
        _
      %p314 = scmp.lt.s32.totalorder %s23, 2
      // Predicated region
      $region41: #{tpu_custom_call.1} parent=5 // pred_check
        %p315 = pneg %p314
      $region42: #{tpu_custom_call.1} parent=5 // pred_check_branch
        %317 = sbr.rel (%p315) target = $region44
      $region43: #{tpu_custom_call.1} parent=5 // pred_region
        // Predicated region
        $region45: #{tpu_custom_call.1} parent=43 // pred_check
          %p318 = pneg %p43
        $region46: #{tpu_custom_call.1} parent=43 // pred_check_branch
          %320 = sbr.rel (%p318) target = $region48
        $region47: #{tpu_custom_call.1} parent=43 // pred_region
          %s321 = sand.u32 %s33, 1
          %s322 = scalar_lea.sflag [#allocation3], %s321
          %s323 = sand.u32 %s33, 1
          %s324 = smul.addr %s323, 8
          %s325 = scalar_lea.vmem [#allocation2], %s324
          %s327 = ssub.s32 128, 128
          %328 = vsyncadd %s322, %s327
          %s329 = smul.addr %s23, 128
          %s330 = scalar_lea.hbm %s0, %s329
          %s332 = sshll.u32 %s325, 4
          %s333 = int_to_ptr.vmem [resolvable:$true] %s332
          %335 = dma.hbm_to_vmem [thread:$0]  %s330, 128, %s333, %s322
        $region48: #{tpu_custom_call.1} parent=43 // pred_fallthru
          _
        // Predicated region
        $region49: #{tpu_custom_call.1} parent=43 // pred_check
          %p336 = pneg %p69
        $region50: #{tpu_custom_call.1} parent=43 // pred_check_branch
          %338 = sbr.rel (%p336) target = $region52
        $region51: #{tpu_custom_call.1} parent=43 // pred_region
          %s339 = smul.u32 2, %s23
          %p340 = scmp.lt.s32.totalorder %s339, 3
          %s341 = scalar_select %p340, %s339, 3
          %s342 = smul.addr %s341, 8
          %s343 = scalar_lea.vmem %s1, %s342
          %s344 = smul.u32 2, %s23
        $region52: #{tpu_custom_call.1} parent=43 // pred_fallthru
          _
      $region44: #{tpu_custom_call.1} parent=5 // pred_fallthru
        _
      %p345 = scmp.le.s32.totalorder 1, %s23
      %p346 = scmp.lt.s32.totalorder %s23, 3
      %p347 = pnand %p345, %p346
      %p348 = pneg %p347
      // Predicated region
      $region53: #{tpu_custom_call.1} parent=5 // pred_check
        _
      $region54: #{tpu_custom_call.1} parent=5 // pred_check_branch
        %350 = sbr.rel (%p347) target = $region56
      $region55: #{tpu_custom_call.1} parent=5 // pred_region
        %s351 = ssub.s32 %s23, 1
        %s352 = sand.u32 %s36, 1
        %s353 = scalar_lea.sflag [#allocation3], %s352
        %s354 = sand.u32 %s36, 1
        %s355 = smul.addr %s354, 8
        %s356 = scalar_lea.vmem [#allocation2], %s355
        // Predicated region
        $region57: #{tpu_custom_call.1} parent=55 // pred_check
          %p357 = pneg %p49
        $region58: #{tpu_custom_call.1} parent=55 // pred_check_branch
          %359 = sbr.rel (%p357) target = $region60
        $region59: #{tpu_custom_call.1} parent=55 // pred_region
          %360 = dma.done %s353, 128
        $region60: #{tpu_custom_call.1} parent=55 // pred_fallthru
          _
        // Predicated region
        $region61: #{tpu_custom_call.1} parent=55 // pred_check
          %p361 = pneg %p138
        $region62: #{tpu_custom_call.1} parent=55 // pred_check_branch
          %363 = sbr.rel (%p361) target = $region64
        $region63: #{tpu_custom_call.1} parent=55 // pred_region
          %364 = dma.done [#allocation6], 3072
        $region64: #{tpu_custom_call.1} parent=55 // pred_fallthru
          _
        // Predicated region
        $region65: #{tpu_custom_call.1} parent=55 // pred_check
          %p365 = pneg %p159
        $region66: #{tpu_custom_call.1} parent=55 // pred_check_branch
          %367 = sbr.rel (%p365) target = $region68
        $region67: #{tpu_custom_call.1} parent=55 // pred_region
          %368 = dma.done [#allocation6], 1536
        $region68: #{tpu_custom_call.1} parent=55 // pred_fallthru
          _
        // Predicated region
        $region69: #{tpu_custom_call.1} parent=55 // pred_check
          %p369 = pneg %p201
        $region70: #{tpu_custom_call.1} parent=55 // pred_check_branch
          %371 = sbr.rel (%p369) target = $region72
        $region71: #{tpu_custom_call.1} parent=55 // pred_region
          %372 = dma.done [#allocation9], 6144
        $region72: #{tpu_custom_call.1} parent=55 // pred_fallthru
          _
        %s373 = sand.u32 %s36, 1
        %s374 = scalar_lea.sflag [#allocation3], %s373
        %s375 = sand.u32 %s36, 1
        %s376 = smul.addr %s375, 8
        %s377 = scalar_lea.vmem [#allocation2], %s376
        %p378 = pneg %p49
        %p379 = pneg %p46
        %s380 = smul.u32 2, %s28
        %p381 = scmp.lt.s32.totalorder %s380, 3
        %s382 = scalar_select %p381, %s380, 3
        %s383 = smul.addr %s382, 8
        %s384 = scalar_lea.vmem %s1, %s383
        %p385 = pneg %p75
        %p386 = pneg %p72
        %p387 = pneg %p96
        %p388 = pneg %p93
        %p389 = pneg %p117
        %p390 = pneg %p114
        %p391 = pneg %p138
        %p392 = pneg %p135
        %p393 = pneg %p159
        %p394 = pneg %p156
        %p395 = pneg %p180
        %p396 = pneg %p177
        %p397 = pneg %p201
        %p398 = pneg %p198
        %p399 = pneg %p222
        %p400 = pneg %p219
        %p401 = pneg %p248
        %p402 = pneg %p245
        %s403 = sand.u32 %s235, 1
        %s404 = scalar_lea.sflag [#allocation4], %s403
        %s405 = sand.u32 %s235, 1
        %s406 = smul.addr %s405, 16
        %s407 = scalar_lea.vmem [#allocation10], %s406
        %s408 = smul.u32 2, %s28
        %p409 = scmp.lt.s32.totalorder %s408, 3
        %s410 = scalar_select %p409, %s408, 3
        %s411 = smul.addr %s410, 8
        %s412 = scalar_lea.vmem %s1, %s411
        %s413 = smul.u32 2, %s28
        %s414 = smul.u32 2, %s28
        %v415 = vld [vmem:[%s356] sm:$0xff]
        %v416 = vld [vmem:[%s412] sm:$0xff]
        %v417 = vld [vmem:[%s412 + $0x8] sm:$0xff]
        %v418 = vld [vmem:[%s3] sm:$0xff]
        %v419 = vld [vmem:[%s3 + $0x8] sm:$0xff]
        %vm420 = vcmask 130048
        %v422 = vsel %vm420, %v418, 0
        %v425 = vsel %vm420, %v419, 0
        %427 = vmatprep.subr.mxu0 0.0
        %428 = vmatpush1.msra.mxu0 %v416
        %429 = vmatprep.subr.mxu0 0.0
        %430 = vmatpush1.msra.mxu0 %v417
        %431 = vmatprep.subr.mxu0 0.0
        %432 = vmatpush1.msra.mxu0 0.0
        %433 = vmatprep.subr.mxu0 0.0
        %434 = vmatpush1.msra.mxu0 0.0
        %435 = vmatprep.subr.mxu0 0.0
        %436 = vmatpush1.msra.mxu0 0.0
        %437 = vmatprep.subr.mxu0 0.0
        %438 = vmatpush1.msra.mxu0 0.0
        %439 = vmatprep.subr.mxu0 0.0
        %440 = vmatpush1.msra.mxu0 0.0
        %441 = vmatprep.subr.mxu0 0.0
        %442 = vmatpush1.msra.mxu0 0.0
        %443 = vmatprep.subr.mxu0 0.0
        %444 = vmatpush1.msra.mxu0 0.0
        %445 = vmatprep.subr.mxu0 0.0
        %446 = vmatpush1.msra.mxu0 0.0
        %447 = vmatprep.subr.mxu0 0.0
        %448 = vmatpush1.msra.mxu0 0.0
        %449 = vmatprep.subr.mxu0 0.0
        %450 = vmatpush1.msra.mxu0 0.0
        %451 = vmatprep.subr.mxu0 0.0
        %452 = vmatpush1.msra.mxu0 0.0
        %453 = vmatprep.subr.mxu0 0.0
        %454 = vmatpush1.msra.mxu0 0.0
        %455 = vmatprep.subr.mxu0 0.0
        %456 = vmatpush1.msra.mxu0 0.0
        %457 = vmatprep.subr.mxu0 0.0
        %458 = vmatpush1.msra.mxu0 0.0
        %459 = vmatprep.subr.mxu0 0.0
        %460 = vmatpush1.msra.mxu0 0.0
        %461 = vmatprep.subr.mxu0 0.0
        %462 = vmatpush1.msra.mxu0 0.0
        %463 = vmatprep.subr.mxu0 0.0
        %464 = vmatpush1.msra.mxu0 0.0
        %465 = vmatprep.subr.mxu0 0.0
        %466 = vmatpush1.msra.mxu0 0.0
        %467 = vmatprep.subr.mxu0 0.0
        %468 = vmatpush1.msra.mxu0 0.0
        %469 = vmatprep.subr.mxu0 0.0
        %470 = vmatpush1.msra.mxu0 0.0
        %471 = vmatprep.subr.mxu0 0.0
        %472 = vmatpush1.msra.mxu0 0.0
        %473 = vmatprep.subr.mxu0 0.0
        %474 = vmatpush1.msra.mxu0 0.0
        %475 = vmatprep.subr.mxu0 0.0
        %476 = vmatpush1.msra.mxu0 0.0
        %477 = vmatprep.subr.mxu0 0.0
        %478 = vmatpush1.msra.mxu0 0.0
        %479 = vmatprep.subr.mxu0 0.0
        %480 = vmatpush1.msra.mxu0 0.0
        %481 = vmatprep.subr.mxu0 0.0
        %482 = vmatpush1.msra.mxu0 0.0
        %483 = vmatprep.subr.mxu0 0.0
        %484 = vmatpush1.msra.mxu0 0.0
        %485 = vmatprep.subr.mxu0 0.0
        %486 = vmatpush1.msra.mxu0 0.0
        %487 = vmatprep.subr.mxu0 0.0
        %488 = vmatpush1.msra.mxu0 0.0
        %489 = vmatprep.subr.mxu0 0.0
        %490 = vmatpush1.msra.mxu0 0.0
        %491 = vmatprep.mubr.f32.mxu0 0.0
        %492 = vmatmul.mubr.f32.gmra.mrb[0].mxu0 %v422
        %v493 = vpop.f32.mrb[0].mxu0
        %v494 = vadd.f32 0.0, %v493
        %v495 = vpop.f32.mrb[0].mxu0
        %496 = vmatprep.mubr.f32.mxu0 0.0
        %497 = vmatmul.mubr.f32.gmra.mrb[0].mxu0 %v425
        %v498 = vpop.f32.mrb[0].mxu0
        %v499 = vadd.f32 0.0, %v498
        %v500 = vpop.f32.mrb[0].mxu0
        %501 = vdwg.mxu0
        %s502 = scalar_lea.vmem %s3, 16
        %v503 = vld [vmem:[%s502] sm:$0xff]
        %v504 = vld [vmem:[%s502 + $0x8] sm:$0xff]
        %v506 = vsel %vm420, %v503, 0
        %v509 = vsel %vm420, %v504, 0
        %511 = vmatprep.subr.mxu0 0.0
        %512 = vmatpush1.msra.mxu0 %v416
        %513 = vmatprep.subr.mxu0 0.0
        %514 = vmatpush1.msra.mxu0 %v417
        %515 = vmatprep.subr.mxu0 0.0
        %516 = vmatpush1.msra.mxu0 0.0
        %517 = vmatprep.subr.mxu0 0.0
        %518 = vmatpush1.msra.mxu0 0.0
        %519 = vmatprep.subr.mxu0 0.0
        %520 = vmatpush1.msra.mxu0 0.0
        %521 = vmatprep.subr.mxu0 0.0
        %522 = vmatpush1.msra.mxu0 0.0
        %523 = vmatprep.subr.mxu0 0.0
        %524 = vmatpush1.msra.mxu0 0.0
        %525 = vmatprep.subr.mxu0 0.0
        %526 = vmatpush1.msra.mxu0 0.0
        %527 = vmatprep.subr.mxu0 0.0
        %528 = vmatpush1.msra.mxu0 0.0
        %529 = vmatprep.subr.mxu0 0.0
        %530 = vmatpush1.msra.mxu0 0.0
        %531 = vmatprep.subr.mxu0 0.0
        %532 = vmatpush1.msra.mxu0 0.0
        %533 = vmatprep.subr.mxu0 0.0
        %534 = vmatpush1.msra.mxu0 0.0
        %535 = vmatprep.subr.mxu0 0.0
        %536 = vmatpush1.msra.mxu0 0.0
        %537 = vmatprep.subr.mxu0 0.0
        %538 = vmatpush1.msra.mxu0 0.0
        %539 = vmatprep.subr.mxu0 0.0
        %540 = vmatpush1.msra.mxu0 0.0
        %541 = vmatprep.subr.mxu0 0.0
        %542 = vmatpush1.msra.mxu0 0.0
        %543 = vmatprep.subr.mxu0 0.0
        %544 = vmatpush1.msra.mxu0 0.0
        %545 = vmatprep.subr.mxu0 0.0
        %546 = vmatpush1.msra.mxu0 0.0
        %547 = vmatprep.subr.mxu0 0.0
        %548 = vmatpush1.msra.mxu0 0.0
        %549 = vmatprep.subr.mxu0 0.0
        %550 = vmatpush1.msra.mxu0 0.0
        %551 = vmatprep.subr.mxu0 0.0
        %552 = vmatpush1.msra.mxu0 0.0
        %553 = vmatprep.subr.mxu0 0.0
        %554 = vmatpush1.msra.mxu0 0.0
        %555 = vmatprep.subr.mxu0 0.0
        %556 = vmatpush1.msra.mxu0 0.0
        %557 = vmatprep.subr.mxu0 0.0
        %558 = vmatpush1.msra.mxu0 0.0
        %559 = vmatprep.subr.mxu0 0.0
        %560 = vmatpush1.msra.mxu0 0.0
        %561 = vmatprep.subr.mxu0 0.0
        %562 = vmatpush1.msra.mxu0 0.0
        %563 = vmatprep.subr.mxu0 0.0
        %564 = vmatpush1.msra.mxu0 0.0
        %565 = vmatprep.subr.mxu0 0.0
        %566 = vmatpush1.msra.mxu0 0.0
        %567 = vmatprep.subr.mxu0 0.0
        %568 = vmatpush1.msra.mxu0 0.0
        %569 = vmatprep.subr.mxu0 0.0
        %570 = vmatpush1.msra.mxu0 0.0
        %571 = vmatprep.subr.mxu0 0.0
        %572 = vmatpush1.msra.mxu0 0.0
        %573 = vmatprep.subr.mxu0 0.0
        %574 = vmatpush1.msra.mxu0 0.0
        %575 = vmatprep.mubr.f32.mxu0 0.0
        %576 = vmatmul.mubr.f32.gmra.mrb[0].mxu0 %v506
        %v577 = vpop.f32.mrb[0].mxu0
        %v578 = vadd.f32 0.0, %v577
        %v579 = vpop.f32.mrb[0].mxu0
        %580 = vmatprep.mubr.f32.mxu0 0.0
        %581 = vmatmul.mubr.f32.gmra.mrb[0].mxu0 %v509
        %v582 = vpop.f32.mrb[0].mxu0
        %v583 = vadd.f32 0.0, %v582
        %v584 = vpop.f32.mrb[0].mxu0
        %585 = vdwg.mxu0
        %v586 = vld [vmem:[%s2] sm:$0xff]
        %v587 = vld [vmem:[%s2 + $0x8] sm:$0xff]
        %vm588 = vcmask 64512
        %v590 = vsel %vm588, %v586, 0
        %v593 = vsel %vm588, %v587, 0
        %595 = vmatprep.subr.mxu0 0.0
        %596 = vmatpush1.msra.mxu0 %v415
        %597 = vmatprep.subr.mxu0 0.0
        %598 = vmatpush1.msra.mxu0 0.0
        %599 = vmatprep.subr.mxu0 0.0
        %600 = vmatpush1.msra.mxu0 0.0
        %601 = vmatprep.subr.mxu0 0.0
        %602 = vmatpush1.msra.mxu0 0.0
        %603 = vmatprep.subr.mxu0 0.0
        %604 = vmatpush1.msra.mxu0 0.0
        %605 = vmatprep.subr.mxu0 0.0
        %606 = vmatpush1.msra.mxu0 0.0
        %607 = vmatprep.subr.mxu0 0.0
        %608 = vmatpush1.msra.mxu0 0.0
        %609 = vmatprep.subr.mxu0 0.0
        %610 = vmatpush1.msra.mxu0 0.0
        %611 = vmatprep.subr.mxu0 0.0
        %612 = vmatpush1.msra.mxu0 0.0
        %613 = vmatprep.subr.mxu0 0.0
        %614 = vmatpush1.msra.mxu0 0.0
        %615 = vmatprep.subr.mxu0 0.0
        %616 = vmatpush1.msra.mxu0 0.0
        %617 = vmatprep.subr.mxu0 0.0
        %618 = vmatpush1.msra.mxu0 0.0
        %619 = vmatprep.subr.mxu0 0.0
        %620 = vmatpush1.msra.mxu0 0.0
        %621 = vmatprep.subr.mxu0 0.0
        %622 = vmatpush1.msra.mxu0 0.0
        %623 = vmatprep.subr.mxu0 0.0
        %624 = vmatpush1.msra.mxu0 0.0
        %625 = vmatprep.subr.mxu0 0.0
        %626 = vmatpush1.msra.mxu0 0.0
        %627 = vmatprep.subr.mxu0 0.0
        %628 = vmatpush1.msra.mxu0 0.0
        %629 = vmatprep.subr.mxu0 0.0
        %630 = vmatpush1.msra.mxu0 0.0
        %631 = vmatprep.subr.mxu0 0.0
        %632 = vmatpush1.msra.mxu0 0.0
        %633 = vmatprep.subr.mxu0 0.0
        %634 = vmatpush1.msra.mxu0 0.0
        %635 = vmatprep.subr.mxu0 0.0
        %636 = vmatpush1.msra.mxu0 0.0
        %637 = vmatprep.subr.mxu0 0.0
        %638 = vmatpush1.msra.mxu0 0.0
        %639 = vmatprep.subr.mxu0 0.0
        %640 = vmatpush1.msra.mxu0 0.0
        %641 = vmatprep.subr.mxu0 0.0
        %642 = vmatpush1.msra.mxu0 0.0
        %643 = vmatprep.subr.mxu0 0.0
        %644 = vmatpush1.msra.mxu0 0.0
        %645 = vmatprep.subr.mxu0 0.0
        %646 = vmatpush1.msra.mxu0 0.0
        %647 = vmatprep.subr.mxu0 0.0
        %648 = vmatpush1.msra.mxu0 0.0
        %649 = vmatprep.subr.mxu0 0.0
        %650 = vmatpush1.msra.mxu0 0.0
        %651 = vmatprep.subr.mxu0 0.0
        %652 = vmatpush1.msra.mxu0 0.0
        %653 = vmatprep.subr.mxu0 0.0
        %654 = vmatpush1.msra.mxu0 0.0
        %655 = vmatprep.subr.mxu0 0.0
        %656 = vmatpush1.msra.mxu0 0.0
        %657 = vmatprep.subr.mxu0 0.0
        %658 = vmatpush1.msra.mxu0 0.0
        %659 = vmatprep.mubr.f32.mxu0 0.0
        %660 = vmatmul.mubr.f32.gmra.mrb[0].mxu0 %v590
        %v661 = vpop.f32.mrb[0].mxu0
        %v662 = vadd.f32 0.0, %v661
        %v663 = vpop.f32.mrb[0].mxu0
        %664 = vmatprep.mubr.f32.mxu0 0.0
        %665 = vmatmul.mubr.f32.gmra.mrb[0].mxu0 %v593
        %v666 = vpop.f32.mrb[0].mxu0
        %v667 = vadd.f32 0.0, %v666
        %v668 = vpop.f32.mrb[0].mxu0
        %669 = vdwg.mxu0
        %s670 = scalar_lea.vmem %s2, 16
        %v671 = vld [vmem:[%s670] sm:$0xff]
        %v672 = vld [vmem:[%s670 + $0x8] sm:$0xff]
        %v674 = vsel %vm588, %v671, 0
        %v677 = vsel %vm588, %v672, 0
        %679 = vmatprep.subr.mxu0 0.0
        %680 = vmatpush1.msra.mxu0 %v415
        %681 = vmatprep.subr.mxu0 0.0
        %682 = vmatpush1.msra.mxu0 0.0
        %683 = vmatprep.subr.mxu0 0.0
        %684 = vmatpush1.msra.mxu0 0.0
        %685 = vmatprep.subr.mxu0 0.0
        %686 = vmatpush1.msra.mxu0 0.0
        %687 = vmatprep.subr.mxu0 0.0
        %688 = vmatpush1.msra.mxu0 0.0
        %689 = vmatprep.subr.mxu0 0.0
        %690 = vmatpush1.msra.mxu0 0.0
        %691 = vmatprep.subr.mxu0 0.0
        %692 = vmatpush1.msra.mxu0 0.0
        %693 = vmatprep.subr.mxu0 0.0
        %694 = vmatpush1.msra.mxu0 0.0
        %695 = vmatprep.subr.mxu0 0.0
        %696 = vmatpush1.msra.mxu0 0.0
        %697 = vmatprep.subr.mxu0 0.0
        %698 = vmatpush1.msra.mxu0 0.0
        %699 = vmatprep.subr.mxu0 0.0
        %700 = vmatpush1.msra.mxu0 0.0
        %701 = vmatprep.subr.mxu0 0.0
        %702 = vmatpush1.msra.mxu0 0.0
        %703 = vmatprep.subr.mxu0 0.0
        %704 = vmatpush1.msra.mxu0 0.0
        %705 = vmatprep.subr.mxu0 0.0
        %706 = vmatpush1.msra.mxu0 0.0
        %707 = vmatprep.subr.mxu0 0.0
        %708 = vmatpush1.msra.mxu0 0.0
        %709 = vmatprep.subr.mxu0 0.0
        %710 = vmatpush1.msra.mxu0 0.0
        %711 = vmatprep.subr.mxu0 0.0
        %712 = vmatpush1.msra.mxu0 0.0
        %713 = vmatprep.subr.mxu0 0.0
        %714 = vmatpush1.msra.mxu0 0.0
        %715 = vmatprep.subr.mxu0 0.0
        %716 = vmatpush1.msra.mxu0 0.0
        %717 = vmatprep.subr.mxu0 0.0
        %718 = vmatpush1.msra.mxu0 0.0
        %719 = vmatprep.subr.mxu0 0.0
        %720 = vmatpush1.msra.mxu0 0.0
        %721 = vmatprep.subr.mxu0 0.0
        %722 = vmatpush1.msra.mxu0 0.0
        %723 = vmatprep.subr.mxu0 0.0
        %724 = vmatpush1.msra.mxu0 0.0
        %725 = vmatprep.subr.mxu0 0.0
        %726 = vmatpush1.msra.mxu0 0.0
        %727 = vmatprep.subr.mxu0 0.0
        %728 = vmatpush1.msra.mxu0 0.0
        %729 = vmatprep.subr.mxu0 0.0
        %730 = vmatpush1.msra.mxu0 0.0
        %731 = vmatprep.subr.mxu0 0.0
        %732 = vmatpush1.msra.mxu0 0.0
        %733 = vmatprep.subr.mxu0 0.0
        %734 = vmatpush1.msra.mxu0 0.0
        %735 = vmatprep.subr.mxu0 0.0
        %736 = vmatpush1.msra.mxu0 0.0
        %737 = vmatprep.subr.mxu0 0.0
        %738 = vmatpush1.msra.mxu0 0.0
        %739 = vmatprep.subr.mxu0 0.0
        %740 = vmatpush1.msra.mxu0 0.0
        %741 = vmatprep.subr.mxu0 0.0
        %742 = vmatpush1.msra.mxu0 0.0
        %743 = vmatprep.mubr.f32.mxu0 0.0
        %744 = vmatmul.mubr.f32.gmra.mrb[0].mxu0 %v674
        %v745 = vpop.f32.mrb[0].mxu0
        %v746 = vadd.f32 0.0, %v745
        %v747 = vpop.f32.mrb[0].mxu0
        %748 = vmatprep.mubr.f32.mxu0 0.0
        %749 = vmatmul.mubr.f32.gmra.mrb[0].mxu0 %v677
        %v750 = vpop.f32.mrb[0].mxu0
        %v751 = vadd.f32 0.0, %v750
        %v752 = vpop.f32.mrb[0].mxu0
        %753 = vdwg.mxu0
        %s754 = scalar_lea.vmem %s2, 32
        %v755 = vld [vmem:[%s754] sm:$0xff]
        %v756 = vld [vmem:[%s754 + $0x8] sm:$0xff]
        %v758 = vsel %vm588, %v755, 0
        %v761 = vsel %vm588, %v756, 0
        %763 = vmatprep.subr.mxu0 0.0
        %764 = vmatpush1.msra.mxu0 %v415
        %765 = vmatprep.subr.mxu0 0.0
        %766 = vmatpush1.msra.mxu0 0.0
        %767 = vmatprep.subr.mxu0 0.0
        %768 = vmatpush1.msra.mxu0 0.0
        %769 = vmatprep.subr.mxu0 0.0
        %770 = vmatpush1.msra.mxu0 0.0
        %771 = vmatprep.subr.mxu0 0.0
        %772 = vmatpush1.msra.mxu0 0.0
        %773 = vmatprep.subr.mxu0 0.0
        %774 = vmatpush1.msra.mxu0 0.0
        %775 = vmatprep.subr.mxu0 0.0
        %776 = vmatpush1.msra.mxu0 0.0
        %777 = vmatprep.subr.mxu0 0.0
        %778 = vmatpush1.msra.mxu0 0.0
        %779 = vmatprep.subr.mxu0 0.0
        %780 = vmatpush1.msra.mxu0 0.0
        %781 = vmatprep.subr.mxu0 0.0
        %782 = vmatpush1.msra.mxu0 0.0
        %783 = vmatprep.subr.mxu0 0.0
        %784 = vmatpush1.msra.mxu0 0.0
        %785 = vmatprep.subr.mxu0 0.0
        %786 = vmatpush1.msra.mxu0 0.0
        %787 = vmatprep.subr.mxu0 0.0
        %788 = vmatpush1.msra.mxu0 0.0
        %789 = vmatprep.subr.mxu0 0.0
        %790 = vmatpush1.msra.mxu0 0.0
        %791 = vmatprep.subr.mxu0 0.0
        %792 = vmatpush1.msra.mxu0 0.0
        %793 = vmatprep.subr.mxu0 0.0
        %794 = vmatpush1.msra.mxu0 0.0
        %795 = vmatprep.subr.mxu0 0.0
        %796 = vmatpush1.msra.mxu0 0.0
        %797 = vmatprep.subr.mxu0 0.0
        %798 = vmatpush1.msra.mxu0 0.0
        %799 = vmatprep.subr.mxu0 0.0
        %800 = vmatpush1.msra.mxu0 0.0
        %801 = vmatprep.subr.mxu0 0.0
        %802 = vmatpush1.msra.mxu0 0.0
        %803 = vmatprep.subr.mxu0 0.0
        %804 = vmatpush1.msra.mxu0 0.0
        %805 = vmatprep.subr.mxu0 0.0
        %806 = vmatpush1.msra.mxu0 0.0
        %807 = vmatprep.subr.mxu0 0.0
        %808 = vmatpush1.msra.mxu0 0.0
        %809 = vmatprep.subr.mxu0 0.0
        %810 = vmatpush1.msra.mxu0 0.0
        %811 = vmatprep.subr.mxu0 0.0
        %812 = vmatpush1.msra.mxu0 0.0
        %813 = vmatprep.subr.mxu0 0.0
        %814 = vmatpush1.msra.mxu0 0.0
        %815 = vmatprep.subr.mxu0 0.0
        %816 = vmatpush1.msra.mxu0 0.0
        %817 = vmatprep.subr.mxu0 0.0
        %818 = vmatpush1.msra.mxu0 0.0
        %819 = vmatprep.subr.mxu0 0.0
        %820 = vmatpush1.msra.mxu0 0.0
        %821 = vmatprep.subr.mxu0 0.0
        %822 = vmatpush1.msra.mxu0 0.0
        %823 = vmatprep.subr.mxu0 0.0
        %824 = vmatpush1.msra.mxu0 0.0
        %825 = vmatprep.subr.mxu0 0.0
        %826 = vmatpush1.msra.mxu0 0.0
        %827 = vmatprep.mubr.f32.mxu0 0.0
        %828 = vmatmul.mubr.f32.gmra.mrb[0].mxu0 %v758
        %v829 = vpop.f32.mrb[0].mxu0
        %v830 = vadd.f32 0.0, %v829
        %v831 = vpop.f32.mrb[0].mxu0
        %832 = vmatprep.mubr.f32.mxu0 0.0
        %833 = vmatmul.mubr.f32.gmra.mrb[0].mxu0 %v761
        %v834 = vpop.f32.mrb[0].mxu0
        %v835 = vadd.f32 0.0, %v834
        %v836 = vpop.f32.mrb[0].mxu0
        %837 = vdwg.mxu0
        %v838 = vld [vmem:[#allocation5] sm:$0xff]
        %v839 = vld [vmem:[#allocation5 + $0x8] sm:$0xff]
        %v840 = vld [vmem:[#allocation5 + $0x10] sm:$0xff]
        %v841 = vld [vmem:[#allocation5 + $0x18] sm:$0xff]
        %v842 = vld [vmem:[#allocation5 + $0x20] sm:$0xff]
        %v843 = vld [vmem:[#allocation5 + $0x28] sm:$0xff]
        %v844 = vld [vmem:[#allocation5 + $0x30] sm:$0xff]
        %v845 = vld [vmem:[#allocation5 + $0x38] sm:$0xff]
        %s846 = scalar_lea.vmem [#allocation5], 64
        %v847 = vld [vmem:[%s846] sm:$0xff]
        %v848 = vld [vmem:[%s846 + $0x8] sm:$0xff]
        %v849 = vld [vmem:[%s846 + $0x10] sm:$0xff]
        %v850 = vld [vmem:[%s846 + $0x18] sm:$0xff]
        %v851 = vld [vmem:[%s846 + $0x20] sm:$0xff]
        %v852 = vld [vmem:[%s846 + $0x28] sm:$0xff]
        %v853 = vld [vmem:[%s846 + $0x30] sm:$0xff]
        %v854 = vld [vmem:[%s846 + $0x38] sm:$0xff]
        %vm855 = vcmask 523264
        %v857 = vsel %vm855, %v416, 0
        %v860 = vsel %vm855, %v417, 0
        %862 = vmatprep.subr.mxu0 0.0
        %863 = vmatpush1.msra.mxu0 %v847
        %864 = vmatprep.subr.mxu0 0.0
        %865 = vmatpush1.msra.mxu0 %v848
        %866 = vmatprep.subr.mxu0 0.0
        %867 = vmatpush1.msra.mxu0 %v849
        %868 = vmatprep.subr.mxu0 0.0
        %869 = vmatpush1.msra.mxu0 %v850
        %870 = vmatprep.subr.mxu0 0.0
        %871 = vmatpush1.msra.mxu0 %v851
        %872 = vmatprep.subr.mxu0 0.0
        %873 = vmatpush1.msra.mxu0 %v852
        %874 = vmatprep.subr.mxu0 0.0
        %875 = vmatpush1.msra.mxu0 %v853
        %876 = vmatprep.subr.mxu0 0.0
        %877 = vmatpush1.msra.mxu0 %v854
        %878 = vmatprep.subr.mxu0 0.0
        %879 = vmatpush1.msra.mxu0 0.0
        %880 = vmatprep.subr.mxu0 0.0
        %881 = vmatpush1.msra.mxu0 0.0
        %882 = vmatprep.subr.mxu0 0.0
        %883 = vmatpush1.msra.mxu0 0.0
        %884 = vmatprep.subr.mxu0 0.0
        %885 = vmatpush1.msra.mxu0 0.0
        %886 = vmatprep.subr.mxu0 0.0
        %887 = vmatpush1.msra.mxu0 0.0
        %888 = vmatprep.subr.mxu0 0.0
        %889 = vmatpush1.msra.mxu0 0.0
        %890 = vmatprep.subr.mxu0 0.0
        %891 = vmatpush1.msra.mxu0 0.0
        %892 = vmatprep.subr.mxu0 0.0
        %893 = vmatpush1.msra.mxu0 0.0
        %894 = vmatprep.subr.mxu0 0.0
        %895 = vmatpush1.msra.mxu0 0.0
        %896 = vmatprep.subr.mxu0 0.0
        %897 = vmatpush1.msra.mxu0 0.0
        %898 = vmatprep.subr.mxu0 0.0
        %899 = vmatpush1.msra.mxu0 0.0
        %900 = vmatprep.subr.mxu0 0.0
        %901 = vmatpush1.msra.mxu0 0.0
        %902 = vmatprep.subr.mxu0 0.0
        %903 = vmatpush1.msra.mxu0 0.0
        %904 = vmatprep.subr.mxu0 0.0
        %905 = vmatpush1.msra.mxu0 0.0
        %906 = vmatprep.subr.mxu0 0.0
        %907 = vmatpush1.msra.mxu0 0.0
        %908 = vmatprep.subr.mxu0 0.0
        %909 = vmatpush1.msra.mxu0 0.0
        %910 = vmatprep.subr.mxu0 0.0
        %911 = vmatpush1.msra.mxu0 0.0
        %912 = vmatprep.subr.mxu0 0.0
        %913 = vmatpush1.msra.mxu0 0.0
        %914 = vmatprep.subr.mxu0 0.0
        %915 = vmatpush1.msra.mxu0 0.0
        %916 = vmatprep.subr.mxu0 0.0
        %917 = vmatpush1.msra.mxu0 0.0
        %918 = vmatprep.subr.mxu0 0.0
        %919 = vmatpush1.msra.mxu0 0.0
        %920 = vmatprep.subr.mxu0 0.0
        %921 = vmatpush1.msra.mxu0 0.0
        %922 = vmatprep.subr.mxu0 0.0
        %923 = vmatpush1.msra.mxu0 0.0
        %924 = vmatprep.subr.mxu0 0.0
        %925 = vmatpush1.msra.mxu0 0.0
        %926 = vmatprep.mubr.f32.mxu0 0.0
        %927 = vmatmul.mubr.f32.gmra.mrb[0].mxu0 %v857
        %v928 = vpop.f32.mrb[0].mxu0
        %v929 = vadd.f32 0.0, %v928
        %v930 = vpop.f32.mrb[0].mxu0
        %931 = vmatprep.mubr.f32.mxu0 0.0
        %932 = vmatmul.mubr.f32.gmra.mrb[0].mxu0 %v860
        %v933 = vpop.f32.mrb[0].mxu0
        %v934 = vadd.f32 0.0, %v933
        %v935 = vpop.f32.mrb[0].mxu0
        %936 = vdwg.mxu0
        %v938 = vsel %vm855, %v494, 0
        %v941 = vsel %vm855, %v499, 0
        %943 = vmatprep.subr.mxu0 0.0
        %944 = vmatpush1.msra.mxu0 %v838
        %945 = vmatprep.subr.mxu0 0.0
        %946 = vmatpush1.msra.mxu0 %v839
        %947 = vmatprep.subr.mxu0 0.0
        %948 = vmatpush1.msra.mxu0 %v840
        %949 = vmatprep.subr.mxu0 0.0
        %950 = vmatpush1.msra.mxu0 %v841
        %951 = vmatprep.subr.mxu0 0.0
        %952 = vmatpush1.msra.mxu0 %v842
        %953 = vmatprep.subr.mxu0 0.0
        %954 = vmatpush1.msra.mxu0 %v843
        %955 = vmatprep.subr.mxu0 0.0
        %956 = vmatpush1.msra.mxu0 %v844
        %957 = vmatprep.subr.mxu0 0.0
        %958 = vmatpush1.msra.mxu0 %v845
        %959 = vmatprep.subr.mxu0 0.0
        %960 = vmatpush1.msra.mxu0 0.0
        %961 = vmatprep.subr.mxu0 0.0
        %962 = vmatpush1.msra.mxu0 0.0
        %963 = vmatprep.subr.mxu0 0.0
        %964 = vmatpush1.msra.mxu0 0.0
        %965 = vmatprep.subr.mxu0 0.0
        %966 = vmatpush1.msra.mxu0 0.0
        %967 = vmatprep.subr.mxu0 0.0
        %968 = vmatpush1.msra.mxu0 0.0
        %969 = vmatprep.subr.mxu0 0.0
        %970 = vmatpush1.msra.mxu0 0.0
        %971 = vmatprep.subr.mxu0 0.0
        %972 = vmatpush1.msra.mxu0 0.0
        %973 = vmatprep.subr.mxu0 0.0
        %974 = vmatpush1.msra.mxu0 0.0
        %975 = vmatprep.subr.mxu0 0.0
        %976 = vmatpush1.msra.mxu0 0.0
        %977 = vmatprep.subr.mxu0 0.0
        %978 = vmatpush1.msra.mxu0 0.0
        %979 = vmatprep.subr.mxu0 0.0
        %980 = vmatpush1.msra.mxu0 0.0
        %981 = vmatprep.subr.mxu0 0.0
        %982 = vmatpush1.msra.mxu0 0.0
        %983 = vmatprep.subr.mxu0 0.0
        %984 = vmatpush1.msra.mxu0 0.0
        %985 = vmatprep.subr.mxu0 0.0
        %986 = vmatpush1.msra.mxu0 0.0
        %987 = vmatprep.subr.mxu0 0.0
        %988 = vmatpush1.msra.mxu0 0.0
        %989 = vmatprep.subr.mxu0 0.0
        %990 = vmatpush1.msra.mxu0 0.0
        %991 = vmatprep.subr.mxu0 0.0
        %992 = vmatpush1.msra.mxu0 0.0
        %993 = vmatprep.subr.mxu0 0.0
        %994 = vmatpush1.msra.mxu0 0.0
        %995 = vmatprep.subr.mxu0 0.0
        %996 = vmatpush1.msra.mxu0 0.0
        %997 = vmatprep.subr.mxu0 0.0
        %998 = vmatpush1.msra.mxu0 0.0
        %999 = vmatprep.subr.mxu0 0.0
        %1000 = vmatpush1.msra.mxu0 0.0
        %1001 = vmatprep.subr.mxu0 0.0
        %1002 = vmatpush1.msra.mxu0 0.0
        %1003 = vmatprep.subr.mxu0 0.0
        %1004 = vmatpush1.msra.mxu0 0.0
        %1005 = vmatprep.subr.mxu0 0.0
        %1006 = vmatpush1.msra.mxu0 0.0
        %1007 = vmatprep.mubr.f32.mxu0 0.0
        %1008 = vmatmul.mubr.f32.gmra.mrb[0].mxu0 %v938
        %v1009 = vpop.f32.mrb[0].mxu0
        %v1010 = vadd.f32 %v929, %v1009
        %v1011 = vpop.f32.mrb[0].mxu0
        %1012 = vmatprep.mubr.f32.mxu0 0.0
        %1013 = vmatmul.mubr.f32.gmra.mrb[0].mxu0 %v941
        %v1014 = vpop.f32.mrb[0].mxu0
        %v1015 = vadd.f32 %v934, %v1014
        %v1016 = vpop.f32.mrb[0].mxu0
        %1017 = vdwg.mxu0
        %s1018 = scalar_lea.vmem [#allocation5], 128
        %v1019 = vld [vmem:[%s1018] sm:$0xff]
        %v1020 = vld [vmem:[%s1018 + $0x8] sm:$0xff]
        %v1021 = vld [vmem:[%s1018 + $0x10] sm:$0xff]
        %v1022 = vld [vmem:[%s1018 + $0x18] sm:$0xff]
        %v1023 = vld [vmem:[%s1018 + $0x20] sm:$0xff]
        %v1024 = vld [vmem:[%s1018 + $0x28] sm:$0xff]
        %v1025 = vld [vmem:[%s1018 + $0x30] sm:$0xff]
        %v1026 = vld [vmem:[%s1018 + $0x38] sm:$0xff]
        %v1028 = vsel %vm855, %v578, 0
        %v1031 = vsel %vm855, %v583, 0
        %1033 = vmatprep.subr.mxu0 0.0
        %1034 = vmatpush1.msra.mxu0 %v1019
        %1035 = vmatprep.subr.mxu0 0.0
        %1036 = vmatpush1.msra.mxu0 %v1020
        %1037 = vmatprep.subr.mxu0 0.0
        %1038 = vmatpush1.msra.mxu0 %v1021
        %1039 = vmatprep.subr.mxu0 0.0
        %1040 = vmatpush1.msra.mxu0 %v1022
        %1041 = vmatprep.subr.mxu0 0.0
        %1042 = vmatpush1.msra.mxu0 %v1023
        %1043 = vmatprep.subr.mxu0 0.0
        %1044 = vmatpush1.msra.mxu0 %v1024
        %1045 = vmatprep.subr.mxu0 0.0
        %1046 = vmatpush1.msra.mxu0 %v1025
        %1047 = vmatprep.subr.mxu0 0.0
        %1048 = vmatpush1.msra.mxu0 %v1026
        %1049 = vmatprep.subr.mxu0 0.0
        %1050 = vmatpush1.msra.mxu0 0.0
        %1051 = vmatprep.subr.mxu0 0.0
        %1052 = vmatpush1.msra.mxu0 0.0
        %1053 = vmatprep.subr.mxu0 0.0
        %1054 = vmatpush1.msra.mxu0 0.0
        %1055 = vmatprep.subr.mxu0 0.0
        %1056 = vmatpush1.msra.mxu0 0.0
        %1057 = vmatprep.subr.mxu0 0.0
        %1058 = vmatpush1.msra.mxu0 0.0
        %1059 = vmatprep.subr.mxu0 0.0
        %1060 = vmatpush1.msra.mxu0 0.0
        %1061 = vmatprep.subr.mxu0 0.0
        %1062 = vmatpush1.msra.mxu0 0.0
        %1063 = vmatprep.subr.mxu0 0.0
        %1064 = vmatpush1.msra.mxu0 0.0
        %1065 = vmatprep.subr.mxu0 0.0
        %1066 = vmatpush1.msra.mxu0 0.0
        %1067 = vmatprep.subr.mxu0 0.0
        %1068 = vmatpush1.msra.mxu0 0.0
        %1069 = vmatprep.subr.mxu0 0.0
        %1070 = vmatpush1.msra.mxu0 0.0
        %1071 = vmatprep.subr.mxu0 0.0
        %1072 = vmatpush1.msra.mxu0 0.0
        %1073 = vmatprep.subr.mxu0 0.0
        %1074 = vmatpush1.msra.mxu0 0.0
        %1075 = vmatprep.subr.mxu0 0.0
        %1076 = vmatpush1.msra.mxu0 0.0
        %1077 = vmatprep.subr.mxu0 0.0
        %1078 = vmatpush1.msra.mxu0 0.0
        %1079 = vmatprep.subr.mxu0 0.0
        %1080 = vmatpush1.msra.mxu0 0.0
        %1081 = vmatprep.subr.mxu0 0.0
        %1082 = vmatpush1.msra.mxu0 0.0
        %1083 = vmatprep.subr.mxu0 0.0
        %1084 = vmatpush1.msra.mxu0 0.0
        %1085 = vmatprep.subr.mxu0 0.0
        %1086 = vmatpush1.msra.mxu0 0.0
        %1087 = vmatprep.subr.mxu0 0.0
        %1088 = vmatpush1.msra.mxu0 0.0
        %1089 = vmatprep.subr.mxu0 0.0
        %1090 = vmatpush1.msra.mxu0 0.0
        %1091 = vmatprep.subr.mxu0 0.0
        %1092 = vmatpush1.msra.mxu0 0.0
        %1093 = vmatprep.subr.mxu0 0.0
        %1094 = vmatpush1.msra.mxu0 0.0
        %1095 = vmatprep.subr.mxu0 0.0
        %1096 = vmatpush1.msra.mxu0 0.0
        %1097 = vmatprep.mubr.f32.mxu0 0.0
        %1098 = vmatmul.mubr.f32.gmra.mrb[0].mxu0 %v1028
        %v1099 = vpop.f32.mrb[0].mxu0
        %v1100 = vadd.f32 0.0, %v1099
        %v1101 = vpop.f32.mrb[0].mxu0
        %1102 = vmatprep.mubr.f32.mxu0 0.0
        %1103 = vmatmul.mubr.f32.gmra.mrb[0].mxu0 %v1031
        %v1104 = vpop.f32.mrb[0].mxu0
        %v1105 = vadd.f32 0.0, %v1104
        %v1106 = vpop.f32.mrb[0].mxu0
        %1107 = vdwg.mxu0
        %v1108 = vadd.f32 %v1010, %v1100
        %v1109 = vadd.f32 %v1015, %v1105
        %v1110 = vld [vmem:[#allocation7] sm:$0xff]
        %v1111 = vld [vmem:[#allocation7 + $0x8] sm:$0xff]
        %v1112 = vld [vmem:[#allocation7 + $0x10] sm:$0xff]
        %v1113 = vld [vmem:[#allocation7 + $0x18] sm:$0xff]
        %vm1114 = vcmask 261120
        %v1116 = vsel %vm1114, %v662, 0
        %v1119 = vsel %vm1114, %v667, 0
        %1121 = vmatprep.subr.mxu0 0.0
        %1122 = vmatpush1.msra.mxu0 %v1110
        %1123 = vmatprep.subr.mxu0 0.0
        %1124 = vmatpush1.msra.mxu0 %v1111
        %1125 = vmatprep.subr.mxu0 0.0
        %1126 = vmatpush1.msra.mxu0 %v1112
        %1127 = vmatprep.subr.mxu0 0.0
        %1128 = vmatpush1.msra.mxu0 %v1113
        %1129 = vmatprep.subr.mxu0 0.0
        %1130 = vmatpush1.msra.mxu0 0.0
        %1131 = vmatprep.subr.mxu0 0.0
        %1132 = vmatpush1.msra.mxu0 0.0
        %1133 = vmatprep.subr.mxu0 0.0
        %1134 = vmatpush1.msra.mxu0 0.0
        %1135 = vmatprep.subr.mxu0 0.0
        %1136 = vmatpush1.msra.mxu0 0.0
        %1137 = vmatprep.subr.mxu0 0.0
        %1138 = vmatpush1.msra.mxu0 0.0
        %1139 = vmatprep.subr.mxu0 0.0
        %1140 = vmatpush1.msra.mxu0 0.0
        %1141 = vmatprep.subr.mxu0 0.0
        %1142 = vmatpush1.msra.mxu0 0.0
        %1143 = vmatprep.subr.mxu0 0.0
        %1144 = vmatpush1.msra.mxu0 0.0
        %1145 = vmatprep.subr.mxu0 0.0
        %1146 = vmatpush1.msra.mxu0 0.0
        %1147 = vmatprep.subr.mxu0 0.0
        %1148 = vmatpush1.msra.mxu0 0.0
        %1149 = vmatprep.subr.mxu0 0.0
        %1150 = vmatpush1.msra.mxu0 0.0
        %1151 = vmatprep.subr.mxu0 0.0
        %1152 = vmatpush1.msra.mxu0 0.0
        %1153 = vmatprep.subr.mxu0 0.0
        %1154 = vmatpush1.msra.mxu0 0.0
        %1155 = vmatprep.subr.mxu0 0.0
        %1156 = vmatpush1.msra.mxu0 0.0
        %1157 = vmatprep.subr.mxu0 0.0
        %1158 = vmatpush1.msra.mxu0 0.0
        %1159 = vmatprep.subr.mxu0 0.0
        %1160 = vmatpush1.msra.mxu0 0.0
        %1161 = vmatprep.subr.mxu0 0.0
        %1162 = vmatpush1.msra.mxu0 0.0
        %1163 = vmatprep.subr.mxu0 0.0
        %1164 = vmatpush1.msra.mxu0 0.0
        %1165 = vmatprep.subr.mxu0 0.0
        %1166 = vmatpush1.msra.mxu0 0.0
        %1167 = vmatprep.subr.mxu0 0.0
        %1168 = vmatpush1.msra.mxu0 0.0
        %1169 = vmatprep.subr.mxu0 0.0
        %1170 = vmatpush1.msra.mxu0 0.0
        %1171 = vmatprep.subr.mxu0 0.0
        %1172 = vmatpush1.msra.mxu0 0.0
        %1173 = vmatprep.subr.mxu0 0.0
        %1174 = vmatpush1.msra.mxu0 0.0
        %1175 = vmatprep.subr.mxu0 0.0
        %1176 = vmatpush1.msra.mxu0 0.0
        %1177 = vmatprep.subr.mxu0 0.0
        %1178 = vmatpush1.msra.mxu0 0.0
        %1179 = vmatprep.subr.mxu0 0.0
        %1180 = vmatpush1.msra.mxu0 0.0
        %1181 = vmatprep.subr.mxu0 0.0
        %1182 = vmatpush1.msra.mxu0 0.0
        %1183 = vmatprep.subr.mxu0 0.0
        %1184 = vmatpush1.msra.mxu0 0.0
        %1185 = vmatprep.mubr.f32.mxu0 0.0
        %1186 = vmatmul.mubr.f32.gmra.mrb[0].mxu0 %v1116
        %v1187 = vpop.f32.mrb[0].mxu0
        %v1188 = vadd.f32 0.0, %v1187
        %v1189 = vpop.f32.mrb[0].mxu0
        %1190 = vmatprep.mubr.f32.mxu0 0.0
        %1191 = vmatmul.mubr.f32.gmra.mrb[0].mxu0 %v1119
        %v1192 = vpop.f32.mrb[0].mxu0
        %v1193 = vadd.f32 0.0, %v1192
        %v1194 = vpop.f32.mrb[0].mxu0
        %1195 = vdwg.mxu0
        %v1196 = vadd.f32 %v1108, %v1188
        %v1197 = vadd.f32 %v1109, %v1193
        %s1198 = scalar_lea.vmem [#allocation7], 32
        %v1199 = vld [vmem:[%s1198] sm:$0xff]
        %v1200 = vld [vmem:[%s1198 + $0x8] sm:$0xff]
        %v1201 = vld [vmem:[%s1198 + $0x10] sm:$0xff]
        %v1202 = vld [vmem:[%s1198 + $0x18] sm:$0xff]
        %v1204 = vsel %vm1114, %v746, 0
        %v1207 = vsel %vm1114, %v751, 0
        %1209 = vmatprep.subr.mxu0 0.0
        %1210 = vmatpush1.msra.mxu0 %v1199
        %1211 = vmatprep.subr.mxu0 0.0
        %1212 = vmatpush1.msra.mxu0 %v1200
        %1213 = vmatprep.subr.mxu0 0.0
        %1214 = vmatpush1.msra.mxu0 %v1201
        %1215 = vmatprep.subr.mxu0 0.0
        %1216 = vmatpush1.msra.mxu0 %v1202
        %1217 = vmatprep.subr.mxu0 0.0
        %1218 = vmatpush1.msra.mxu0 0.0
        %1219 = vmatprep.subr.mxu0 0.0
        %1220 = vmatpush1.msra.mxu0 0.0
        %1221 = vmatprep.subr.mxu0 0.0
        %1222 = vmatpush1.msra.mxu0 0.0
        %1223 = vmatprep.subr.mxu0 0.0
        %1224 = vmatpush1.msra.mxu0 0.0
        %1225 = vmatprep.subr.mxu0 0.0
        %1226 = vmatpush1.msra.mxu0 0.0
        %1227 = vmatprep.subr.mxu0 0.0
        %1228 = vmatpush1.msra.mxu0 0.0
        %1229 = vmatprep.subr.mxu0 0.0
        %1230 = vmatpush1.msra.mxu0 0.0
        %1231 = vmatprep.subr.mxu0 0.0
        %1232 = vmatpush1.msra.mxu0 0.0
        %1233 = vmatprep.subr.mxu0 0.0
        %1234 = vmatpush1.msra.mxu0 0.0
        %1235 = vmatprep.subr.mxu0 0.0
        %1236 = vmatpush1.msra.mxu0 0.0
        %1237 = vmatprep.subr.mxu0 0.0
        %1238 = vmatpush1.msra.mxu0 0.0
        %1239 = vmatprep.subr.mxu0 0.0
        %1240 = vmatpush1.msra.mxu0 0.0
        %1241 = vmatprep.subr.mxu0 0.0
        %1242 = vmatpush1.msra.mxu0 0.0
        %1243 = vmatprep.subr.mxu0 0.0
        %1244 = vmatpush1.msra.mxu0 0.0
        %1245 = vmatprep.subr.mxu0 0.0
        %1246 = vmatpush1.msra.mxu0 0.0
        %1247 = vmatprep.subr.mxu0 0.0
        %1248 = vmatpush1.msra.mxu0 0.0
        %1249 = vmatprep.subr.mxu0 0.0
        %1250 = vmatpush1.msra.mxu0 0.0
        %1251 = vmatprep.subr.mxu0 0.0
        %1252 = vmatpush1.msra.mxu0 0.0
        %1253 = vmatprep.subr.mxu0 0.0
        %1254 = vmatpush1.msra.mxu0 0.0
        %1255 = vmatprep.subr.mxu0 0.0
        %1256 = vmatpush1.msra.mxu0 0.0
        %1257 = vmatprep.subr.mxu0 0.0
        %1258 = vmatpush1.msra.mxu0 0.0
        %1259 = vmatprep.subr.mxu0 0.0
        %1260 = vmatpush1.msra.mxu0 0.0
        %1261 = vmatprep.subr.mxu0 0.0
        %1262 = vmatpush1.msra.mxu0 0.0
        %1263 = vmatprep.subr.mxu0 0.0
        %1264 = vmatpush1.msra.mxu0 0.0
        %1265 = vmatprep.subr.mxu0 0.0
        %1266 = vmatpush1.msra.mxu0 0.0
        %1267 = vmatprep.subr.mxu0 0.0
        %1268 = vmatpush1.msra.mxu0 0.0
        %1269 = vmatprep.subr.mxu0 0.0
        %1270 = vmatpush1.msra.mxu0 0.0
        %1271 = vmatprep.subr.mxu0 0.0
        %1272 = vmatpush1.msra.mxu0 0.0
        %1273 = vmatprep.mubr.f32.mxu0 0.0
        %1274 = vmatmul.mubr.f32.gmra.mrb[0].mxu0 %v1204
        %v1275 = vpop.f32.mrb[0].mxu0
        %v1276 = vadd.f32 0.0, %v1275
        %v1277 = vpop.f32.mrb[0].mxu0
        %1278 = vmatprep.mubr.f32.mxu0 0.0
        %1279 = vmatmul.mubr.f32.gmra.mrb[0].mxu0 %v1207
        %v1280 = vpop.f32.mrb[0].mxu0
        %v1281 = vadd.f32 0.0, %v1280
        %v1282 = vpop.f32.mrb[0].mxu0
        %1283 = vdwg.mxu0
        %v1284 = vadd.f32 %v1196, %v1276
        %v1285 = vadd.f32 %v1197, %v1281
        %s1286 = scalar_lea.vmem [#allocation7], 64
        %v1287 = vld [vmem:[%s1286] sm:$0xff]
        %v1288 = vld [vmem:[%s1286 + $0x8] sm:$0xff]
        %v1289 = vld [vmem:[%s1286 + $0x10] sm:$0xff]
        %v1290 = vld [vmem:[%s1286 + $0x18] sm:$0xff]
        %v1292 = vsel %vm1114, %v830, 0
        %v1295 = vsel %vm1114, %v835, 0
        %1297 = vmatprep.subr.mxu0 0.0
        %1298 = vmatpush1.msra.mxu0 %v1287
        %1299 = vmatprep.subr.mxu0 0.0
        %1300 = vmatpush1.msra.mxu0 %v1288
        %1301 = vmatprep.subr.mxu0 0.0
        %1302 = vmatpush1.msra.mxu0 %v1289
        %1303 = vmatprep.subr.mxu0 0.0
        %1304 = vmatpush1.msra.mxu0 %v1290
        %1305 = vmatprep.subr.mxu0 0.0
        %1306 = vmatpush1.msra.mxu0 0.0
        %1307 = vmatprep.subr.mxu0 0.0
        %1308 = vmatpush1.msra.mxu0 0.0
        %1309 = vmatprep.subr.mxu0 0.0
        %1310 = vmatpush1.msra.mxu0 0.0
        %1311 = vmatprep.subr.mxu0 0.0
        %1312 = vmatpush1.msra.mxu0 0.0
        %1313 = vmatprep.subr.mxu0 0.0
        %1314 = vmatpush1.msra.mxu0 0.0
        %1315 = vmatprep.subr.mxu0 0.0
        %1316 = vmatpush1.msra.mxu0 0.0
        %1317 = vmatprep.subr.mxu0 0.0
        %1318 = vmatpush1.msra.mxu0 0.0
        %1319 = vmatprep.subr.mxu0 0.0
        %1320 = vmatpush1.msra.mxu0 0.0
        %1321 = vmatprep.subr.mxu0 0.0
        %1322 = vmatpush1.msra.mxu0 0.0
        %1323 = vmatprep.subr.mxu0 0.0
        %1324 = vmatpush1.msra.mxu0 0.0
        %1325 = vmatprep.subr.mxu0 0.0
        %1326 = vmatpush1.msra.mxu0 0.0
        %1327 = vmatprep.subr.mxu0 0.0
        %1328 = vmatpush1.msra.mxu0 0.0
        %1329 = vmatprep.subr.mxu0 0.0
        %1330 = vmatpush1.msra.mxu0 0.0
        %1331 = vmatprep.subr.mxu0 0.0
        %1332 = vmatpush1.msra.mxu0 0.0
        %1333 = vmatprep.subr.mxu0 0.0
        %1334 = vmatpush1.msra.mxu0 0.0
        %1335 = vmatprep.subr.mxu0 0.0
        %1336 = vmatpush1.msra.mxu0 0.0
        %1337 = vmatprep.subr.mxu0 0.0
        %1338 = vmatpush1.msra.mxu0 0.0
        %1339 = vmatprep.subr.mxu0 0.0
        %1340 = vmatpush1.msra.mxu0 0.0
        %1341 = vmatprep.subr.mxu0 0.0
        %1342 = vmatpush1.msra.mxu0 0.0
        %1343 = vmatprep.subr.mxu0 0.0
        %1344 = vmatpush1.msra.mxu0 0.0
        %1345 = vmatprep.subr.mxu0 0.0
        %1346 = vmatpush1.msra.mxu0 0.0
        %1347 = vmatprep.subr.mxu0 0.0
        %1348 = vmatpush1.msra.mxu0 0.0
        %1349 = vmatprep.subr.mxu0 0.0
        %1350 = vmatpush1.msra.mxu0 0.0
        %1351 = vmatprep.subr.mxu0 0.0
        %1352 = vmatpush1.msra.mxu0 0.0
        %1353 = vmatprep.subr.mxu0 0.0
        %1354 = vmatpush1.msra.mxu0 0.0
        %1355 = vmatprep.subr.mxu0 0.0
        %1356 = vmatpush1.msra.mxu0 0.0
        %1357 = vmatprep.subr.mxu0 0.0
        %1358 = vmatpush1.msra.mxu0 0.0
        %1359 = vmatprep.subr.mxu0 0.0
        %1360 = vmatpush1.msra.mxu0 0.0
        %1361 = vmatprep.mubr.f32.mxu0 0.0
        %1362 = vmatmul.mubr.f32.gmra.mrb[0].mxu0 %v1292
        %v1363 = vpop.f32.mrb[0].mxu0
        %v1364 = vadd.f32 0.0, %v1363
        %v1365 = vpop.f32.mrb[0].mxu0
        %1366 = vmatprep.mubr.f32.mxu0 0.0
        %1367 = vmatmul.mubr.f32.gmra.mrb[0].mxu0 %v1295
        %v1368 = vpop.f32.mrb[0].mxu0
        %v1369 = vadd.f32 0.0, %v1368
        %v1370 = vpop.f32.mrb[0].mxu0
        %1371 = vdwg.mxu0
        %v1372 = vadd.f32 %v1284, %v1364
        %v1373 = vadd.f32 %v1285, %v1369
        %v1374 = vld [vmem:[%s6] sm:$0x1]
        %v1376 = vlaneseq
        %v1377 = vshrl.u32 %v1376, 7
        %v1378 = vsub.s32 0, %v1377
        %v1379 = vrot.slane %v1374, %v1378
        %v1381 = vadd.f32 %v1372, %v1379
        %v1382 = vadd.f32 %v1373, %v1379
        %v1383 = vmax.f32 %v1381, 0.0
        %v1384 = vmax.f32 %v1382, 0.0
        %1385 = vmatprep.subr.mxu0 0.0
        %1386 = vmatpush1.msra.mxu0 %v1383
        %1387 = vmatprep.subr.mxu0 0.0
        %1388 = vmatpush1.msra.mxu0 %v1384
        %1389 = vmatprep.subr.mxu0 0.0
        %1390 = vmatpush1.msra.mxu0 0.0
        %1391 = vmatprep.subr.mxu0 0.0
        %1392 = vmatpush1.msra.mxu0 0.0
        %1393 = vmatprep.subr.mxu0 0.0
        %1394 = vmatpush1.msra.mxu0 0.0
        %1395 = vmatprep.subr.mxu0 0.0
        %1396 = vmatpush1.msra.mxu0 0.0
        %1397 = vmatprep.subr.mxu0 0.0
        %1398 = vmatpush1.msra.mxu0 0.0
        %1399 = vmatprep.subr.mxu0 0.0
        %1400 = vmatpush1.msra.mxu0 0.0
        %1401 = vmatprep.subr.mxu0 0.0
        %1402 = vmatpush1.msra.mxu0 0.0
        %1403 = vmatprep.subr.mxu0 0.0
        %1404 = vmatpush1.msra.mxu0 0.0
        %1405 = vmatprep.subr.mxu0 0.0
        %1406 = vmatpush1.msra.mxu0 0.0
        %1407 = vmatprep.subr.mxu0 0.0
        %1408 = vmatpush1.msra.mxu0 0.0
        %1409 = vmatprep.subr.mxu0 0.0
        %1410 = vmatpush1.msra.mxu0 0.0
        %1411 = vmatprep.subr.mxu0 0.0
        %1412 = vmatpush1.msra.mxu0 0.0
        %1413 = vmatprep.subr.mxu0 0.0
        %1414 = vmatpush1.msra.mxu0 0.0
        %1415 = vmatprep.subr.mxu0 0.0
        %1416 = vmatpush1.msra.mxu0 0.0
        %1417 = vmatprep.subr.mxu0 0.0
        %1418 = vmatpush1.msra.mxu0 0.0
        %1419 = vmatprep.subr.mxu0 0.0
        %1420 = vmatpush1.msra.mxu0 0.0
        %1421 = vmatprep.subr.mxu0 0.0
        %1422 = vmatpush1.msra.mxu0 0.0
        %1423 = vmatprep.subr.mxu0 0.0
        %1424 = vmatpush1.msra.mxu0 0.0
        %1425 = vmatprep.subr.mxu0 0.0
        %1426 = vmatpush1.msra.mxu0 0.0
        %1427 = vmatprep.subr.mxu0 0.0
        %1428 = vmatpush1.msra.mxu0 0.0
        %1429 = vmatprep.subr.mxu0 0.0
        %1430 = vmatpush1.msra.mxu0 0.0
        %1431 = vmatprep.subr.mxu0 0.0
        %1432 = vmatpush1.msra.mxu0 0.0
        %1433 = vmatprep.subr.mxu0 0.0
        %1434 = vmatpush1.msra.mxu0 0.0
        %1435 = vmatprep.subr.mxu0 0.0
        %1436 = vmatpush1.msra.mxu0 0.0
        %1437 = vmatprep.subr.mxu0 0.0
        %1438 = vmatpush1.msra.mxu0 0.0
        %1439 = vmatprep.subr.mxu0 0.0
        %1440 = vmatpush1.msra.mxu0 0.0
        %1441 = vmatprep.subr.mxu0 0.0
        %1442 = vmatpush1.msra.mxu0 0.0
        %1443 = vmatprep.subr.mxu0 0.0
        %1444 = vmatpush1.msra.mxu0 0.0
        %1445 = vmatprep.subr.mxu0 0.0
        %1446 = vmatpush1.msra.mxu0 0.0
        %1447 = vmatprep.subr.mxu0 0.0
        %1448 = vmatpush1.msra.mxu0 0.0
        %1449 = vmatprep.mubr.f32.mxu0 0.0
        %1450 = vmatmul.mubr.f32.gmra.mrb[0].mxu0 %v422
        %v1451 = vpop.f32.mrb[0].mxu0
        %v1452 = vadd.f32 0.0, %v1451
        %v1453 = vpop.f32.mrb[0].mxu0
        %1454 = vmatprep.mubr.f32.mxu0 0.0
        %1455 = vmatmul.mubr.f32.gmra.mrb[0].mxu0 %v425
        %v1456 = vpop.f32.mrb[0].mxu0
        %v1457 = vadd.f32 0.0, %v1456
        %v1458 = vpop.f32.mrb[0].mxu0
        %1459 = vdwg.mxu0
        %1460 = vmatprep.subr.mxu0 0.0
        %1461 = vmatpush1.msra.mxu0 %v1383
        %1462 = vmatprep.subr.mxu0 0.0
        %1463 = vmatpush1.msra.mxu0 %v1384
        %1464 = vmatprep.subr.mxu0 0.0
        %1465 = vmatpush1.msra.mxu0 0.0
        %1466 = vmatprep.subr.mxu0 0.0
        %1467 = vmatpush1.msra.mxu0 0.0
        %1468 = vmatprep.subr.mxu0 0.0
        %1469 = vmatpush1.msra.mxu0 0.0
        %1470 = vmatprep.subr.mxu0 0.0
        %1471 = vmatpush1.msra.mxu0 0.0
        %1472 = vmatprep.subr.mxu0 0.0
        %1473 = vmatpush1.msra.mxu0 0.0
        %1474 = vmatprep.subr.mxu0 0.0
        %1475 = vmatpush1.msra.mxu0 0.0
        %1476 = vmatprep.subr.mxu0 0.0
        %1477 = vmatpush1.msra.mxu0 0.0
        %1478 = vmatprep.subr.mxu0 0.0
        %1479 = vmatpush1.msra.mxu0 0.0
        %1480 = vmatprep.subr.mxu0 0.0
        %1481 = vmatpush1.msra.mxu0 0.0
        %1482 = vmatprep.subr.mxu0 0.0
        %1483 = vmatpush1.msra.mxu0 0.0
        %1484 = vmatprep.subr.mxu0 0.0
        %1485 = vmatpush1.msra.mxu0 0.0
        %1486 = vmatprep.subr.mxu0 0.0
        %1487 = vmatpush1.msra.mxu0 0.0
        %1488 = vmatprep.subr.mxu0 0.0
        %1489 = vmatpush1.msra.mxu0 0.0
        %1490 = vmatprep.subr.mxu0 0.0
        %1491 = vmatpush1.msra.mxu0 0.0
        %1492 = vmatprep.subr.mxu0 0.0
        %1493 = vmatpush1.msra.mxu0 0.0
        %1494 = vmatprep.subr.mxu0 0.0
        %1495 = vmatpush1.msra.mxu0 0.0
        %1496 = vmatprep.subr.mxu0 0.0
        %1497 = vmatpush1.msra.mxu0 0.0
        %1498 = vmatprep.subr.mxu0 0.0
        %1499 = vmatpush1.msra.mxu0 0.0
        %1500 = vmatprep.subr.mxu0 0.0
        %1501 = vmatpush1.msra.mxu0 0.0
        %1502 = vmatprep.subr.mxu0 0.0
        %1503 = vmatpush1.msra.mxu0 0.0
        %1504 = vmatprep.subr.mxu0 0.0
        %1505 = vmatpush1.msra.mxu0 0.0
        %1506 = vmatprep.subr.mxu0 0.0
        %1507 = vmatpush1.msra.mxu0 0.0
        %1508 = vmatprep.subr.mxu0 0.0
        %1509 = vmatpush1.msra.mxu0 0.0
        %1510 = vmatprep.subr.mxu0 0.0
        %1511 = vmatpush1.msra.mxu0 0.0
        %1512 = vmatprep.subr.mxu0 0.0
        %1513 = vmatpush1.msra.mxu0 0.0
        %1514 = vmatprep.subr.mxu0 0.0
        %1515 = vmatpush1.msra.mxu0 0.0
        %1516 = vmatprep.subr.mxu0 0.0
        %1517 = vmatpush1.msra.mxu0 0.0
        %1518 = vmatprep.subr.mxu0 0.0
        %1519 = vmatpush1.msra.mxu0 0.0
        %1520 = vmatprep.subr.mxu0 0.0
        %1521 = vmatpush1.msra.mxu0 0.0
        %1522 = vmatprep.subr.mxu0 0.0
        %1523 = vmatpush1.msra.mxu0 0.0
        %1524 = vmatprep.mubr.f32.mxu0 0.0
        %1525 = vmatmul.mubr.f32.gmra.mrb[0].mxu0 %v506
        %v1526 = vpop.f32.mrb[0].mxu0
        %v1527 = vadd.f32 0.0, %v1526
        %v1528 = vpop.f32.mrb[0].mxu0
        %1529 = vmatprep.mubr.f32.mxu0 0.0
        %1530 = vmatmul.mubr.f32.gmra.mrb[0].mxu0 %v509
        %v1531 = vpop.f32.mrb[0].mxu0
        %v1532 = vadd.f32 0.0, %v1531
        %v1533 = vpop.f32.mrb[0].mxu0
        %1534 = vdwg.mxu0
        %v1535 = vld [vmem:[#allocation8] sm:$0xff]
        %v1536 = vld [vmem:[#allocation8 + $0x8] sm:$0xff]
        %v1537 = vld [vmem:[#allocation8 + $0x10] sm:$0xff]
        %v1538 = vld [vmem:[#allocation8 + $0x18] sm:$0xff]
        %v1539 = vld [vmem:[#allocation8 + $0x20] sm:$0xff]
        %v1540 = vld [vmem:[#allocation8 + $0x28] sm:$0xff]
        %v1541 = vld [vmem:[#allocation8 + $0x30] sm:$0xff]
        %v1542 = vld [vmem:[#allocation8 + $0x38] sm:$0xff]
        %v1543 = vld [vmem:[#allocation8 + $0x40] sm:$0xff]
        %v1544 = vld [vmem:[#allocation8 + $0x48] sm:$0xff]
        %v1545 = vld [vmem:[#allocation8 + $0x50] sm:$0xff]
        %v1546 = vld [vmem:[#allocation8 + $0x58] sm:$0xff]
        %v1547 = vld [vmem:[#allocation8 + $0x60] sm:$0xff]
        %v1548 = vld [vmem:[#allocation8 + $0x68] sm:$0xff]
        %v1549 = vld [vmem:[#allocation8 + $0x70] sm:$0xff]
        %v1550 = vld [vmem:[#allocation8 + $0x78] sm:$0xff]
        %s1551 = scalar_lea.vmem [#allocation8], 128
        %v1552 = vld [vmem:[%s1551] sm:$0xff]
        %v1553 = vld [vmem:[%s1551 + $0x8] sm:$0xff]
        %v1554 = vld [vmem:[%s1551 + $0x10] sm:$0xff]
        %v1555 = vld [vmem:[%s1551 + $0x18] sm:$0xff]
        %v1556 = vld [vmem:[%s1551 + $0x20] sm:$0xff]
        %v1557 = vld [vmem:[%s1551 + $0x28] sm:$0xff]
        %v1558 = vld [vmem:[%s1551 + $0x30] sm:$0xff]
        %v1559 = vld [vmem:[%s1551 + $0x38] sm:$0xff]
        %v1560 = vld [vmem:[%s1551 + $0x40] sm:$0xff]
        %v1561 = vld [vmem:[%s1551 + $0x48] sm:$0xff]
        %v1562 = vld [vmem:[%s1551 + $0x50] sm:$0xff]
        %v1563 = vld [vmem:[%s1551 + $0x58] sm:$0xff]
        %v1564 = vld [vmem:[%s1551 + $0x60] sm:$0xff]
        %v1565 = vld [vmem:[%s1551 + $0x68] sm:$0xff]
        %v1566 = vld [vmem:[%s1551 + $0x70] sm:$0xff]
        %v1567 = vld [vmem:[%s1551 + $0x78] sm:$0xff]
        %1568 = vmatprep.subr.mxu0 0.0
        %1569 = vmatpush1.msra.mxu0 %v1552
        %1570 = vmatprep.subr.mxu0 0.0
        %1571 = vmatpush1.msra.mxu0 %v1553
        %1572 = vmatprep.subr.mxu0 0.0
        %1573 = vmatpush1.msra.mxu0 %v1554
        %1574 = vmatprep.subr.mxu0 0.0
        %1575 = vmatpush1.msra.mxu0 %v1555
        %1576 = vmatprep.subr.mxu0 0.0
        %1577 = vmatpush1.msra.mxu0 %v1556
        %1578 = vmatprep.subr.mxu0 0.0
        %1579 = vmatpush1.msra.mxu0 %v1557
        %1580 = vmatprep.subr.mxu0 0.0
        %1581 = vmatpush1.msra.mxu0 %v1558
        %1582 = vmatprep.subr.mxu0 0.0
        %1583 = vmatpush1.msra.mxu0 %v1559
        %1584 = vmatprep.subr.mxu0 0.0
        %1585 = vmatpush1.msra.mxu0 %v1560
        %1586 = vmatprep.subr.mxu0 0.0
        %1587 = vmatpush1.msra.mxu0 %v1561
        %1588 = vmatprep.subr.mxu0 0.0
        %1589 = vmatpush1.msra.mxu0 %v1562
        %1590 = vmatprep.subr.mxu0 0.0
        %1591 = vmatpush1.msra.mxu0 %v1563
        %1592 = vmatprep.subr.mxu0 0.0
        %1593 = vmatpush1.msra.mxu0 %v1564
        %1594 = vmatprep.subr.mxu0 0.0
        %1595 = vmatpush1.msra.mxu0 %v1565
        %1596 = vmatprep.subr.mxu0 0.0
        %1597 = vmatpush1.msra.mxu0 %v1566
        %1598 = vmatprep.subr.mxu0 0.0
        %1599 = vmatpush1.msra.mxu0 %v1567
        %1600 = vmatprep.subr.mxu0 0.0
        %1601 = vmatpush1.msra.mxu0 0.0
        %1602 = vmatprep.subr.mxu0 0.0
        %1603 = vmatpush1.msra.mxu0 0.0
        %1604 = vmatprep.subr.mxu0 0.0
        %1605 = vmatpush1.msra.mxu0 0.0
        %1606 = vmatprep.subr.mxu0 0.0
        %1607 = vmatpush1.msra.mxu0 0.0
        %1608 = vmatprep.subr.mxu0 0.0
        %1609 = vmatpush1.msra.mxu0 0.0
        %1610 = vmatprep.subr.mxu0 0.0
        %1611 = vmatpush1.msra.mxu0 0.0
        %1612 = vmatprep.subr.mxu0 0.0
        %1613 = vmatpush1.msra.mxu0 0.0
        %1614 = vmatprep.subr.mxu0 0.0
        %1615 = vmatpush1.msra.mxu0 0.0
        %1616 = vmatprep.subr.mxu0 0.0
        %1617 = vmatpush1.msra.mxu0 0.0
        %1618 = vmatprep.subr.mxu0 0.0
        %1619 = vmatpush1.msra.mxu0 0.0
        %1620 = vmatprep.subr.mxu0 0.0
        %1621 = vmatpush1.msra.mxu0 0.0
        %1622 = vmatprep.subr.mxu0 0.0
        %1623 = vmatpush1.msra.mxu0 0.0
        %1624 = vmatprep.subr.mxu0 0.0
        %1625 = vmatpush1.msra.mxu0 0.0
        %1626 = vmatprep.subr.mxu0 0.0
        %1627 = vmatpush1.msra.mxu0 0.0
        %1628 = vmatprep.subr.mxu0 0.0
        %1629 = vmatpush1.msra.mxu0 0.0
        %1630 = vmatprep.subr.mxu0 0.0
        %1631 = vmatpush1.msra.mxu0 0.0
        %1632 = vmatprep.mubr.f32.mxu0 0.0
        %1633 = vmatmul.mubr.f32.gmra.mrb[0].mxu0 %v1383
        %v1634 = vpop.f32.mrb[0].mxu0
        %v1635 = vadd.f32 0.0, %v1634
        %v1636 = vpop.f32.mrb[0].mxu0
        %1637 = vmatprep.mubr.f32.mxu0 0.0
        %1638 = vmatmul.mubr.f32.gmra.mrb[0].mxu0 %v1384
        %v1639 = vpop.f32.mrb[0].mxu0
        %v1640 = vadd.f32 0.0, %v1639
        %v1641 = vpop.f32.mrb[0].mxu0
        %1642 = vdwg.mxu0
        %1643 = vmatprep.subr.mxu0 0.0
        %1644 = vmatpush1.msra.mxu0 %v1535
        %1645 = vmatprep.subr.mxu0 0.0
        %1646 = vmatpush1.msra.mxu0 %v1536
        %1647 = vmatprep.subr.mxu0 0.0
        %1648 = vmatpush1.msra.mxu0 %v1537
        %1649 = vmatprep.subr.mxu0 0.0
        %1650 = vmatpush1.msra.mxu0 %v1538
        %1651 = vmatprep.subr.mxu0 0.0
        %1652 = vmatpush1.msra.mxu0 %v1539
        %1653 = vmatprep.subr.mxu0 0.0
        %1654 = vmatpush1.msra.mxu0 %v1540
        %1655 = vmatprep.subr.mxu0 0.0
        %1656 = vmatpush1.msra.mxu0 %v1541
        %1657 = vmatprep.subr.mxu0 0.0
        %1658 = vmatpush1.msra.mxu0 %v1542
        %1659 = vmatprep.subr.mxu0 0.0
        %1660 = vmatpush1.msra.mxu0 %v1543
        %1661 = vmatprep.subr.mxu0 0.0
        %1662 = vmatpush1.msra.mxu0 %v1544
        %1663 = vmatprep.subr.mxu0 0.0
        %1664 = vmatpush1.msra.mxu0 %v1545
        %1665 = vmatprep.subr.mxu0 0.0
        %1666 = vmatpush1.msra.mxu0 %v1546
        %1667 = vmatprep.subr.mxu0 0.0
        %1668 = vmatpush1.msra.mxu0 %v1547
        %1669 = vmatprep.subr.mxu0 0.0
        %1670 = vmatpush1.msra.mxu0 %v1548
        %1671 = vmatprep.subr.mxu0 0.0
        %1672 = vmatpush1.msra.mxu0 %v1549
        %1673 = vmatprep.subr.mxu0 0.0
        %1674 = vmatpush1.msra.mxu0 %v1550
        %1675 = vmatprep.subr.mxu0 0.0
        %1676 = vmatpush1.msra.mxu0 0.0
        %1677 = vmatprep.subr.mxu0 0.0
        %1678 = vmatpush1.msra.mxu0 0.0
        %1679 = vmatprep.subr.mxu0 0.0
        %1680 = vmatpush1.msra.mxu0 0.0
        %1681 = vmatprep.subr.mxu0 0.0
        %1682 = vmatpush1.msra.mxu0 0.0
        %1683 = vmatprep.subr.mxu0 0.0
        %1684 = vmatpush1.msra.mxu0 0.0
        %1685 = vmatprep.subr.mxu0 0.0
        %1686 = vmatpush1.msra.mxu0 0.0
        %1687 = vmatprep.subr.mxu0 0.0
        %1688 = vmatpush1.msra.mxu0 0.0
        %1689 = vmatprep.subr.mxu0 0.0
        %1690 = vmatpush1.msra.mxu0 0.0
        %1691 = vmatprep.subr.mxu0 0.0
        %1692 = vmatpush1.msra.mxu0 0.0
        %1693 = vmatprep.subr.mxu0 0.0
        %1694 = vmatpush1.msra.mxu0 0.0
        %1695 = vmatprep.subr.mxu0 0.0
        %1696 = vmatpush1.msra.mxu0 0.0
        %1697 = vmatprep.subr.mxu0 0.0
        %1698 = vmatpush1.msra.mxu0 0.0
        %1699 = vmatprep.subr.mxu0 0.0
        %1700 = vmatpush1.msra.mxu0 0.0
        %1701 = vmatprep.subr.mxu0 0.0
        %1702 = vmatpush1.msra.mxu0 0.0
        %1703 = vmatprep.subr.mxu0 0.0
        %1704 = vmatpush1.msra.mxu0 0.0
        %1705 = vmatprep.subr.mxu0 0.0
        %1706 = vmatpush1.msra.mxu0 0.0
        %1707 = vmatprep.mubr.f32.mxu0 0.0
        %1708 = vmatmul.mubr.f32.gmra.mrb[0].mxu0 %v1452
        %v1709 = vpop.f32.mrb[0].mxu0
        %v1710 = vadd.f32 %v1635, %v1709
        %v1711 = vpop.f32.mrb[0].mxu0
        %1712 = vmatprep.mubr.f32.mxu0 0.0
        %1713 = vmatmul.mubr.f32.gmra.mrb[0].mxu0 %v1457
        %v1714 = vpop.f32.mrb[0].mxu0
        %v1715 = vadd.f32 %v1640, %v1714
        %v1716 = vpop.f32.mrb[0].mxu0
        %1717 = vdwg.mxu0
        %s1718 = scalar_lea.vmem [#allocation8], 256
        %v1719 = vld [vmem:[%s1718] sm:$0xff]
        %v1720 = vld [vmem:[%s1718 + $0x8] sm:$0xff]
        %v1721 = vld [vmem:[%s1718 + $0x10] sm:$0xff]
        %v1722 = vld [vmem:[%s1718 + $0x18] sm:$0xff]
        %v1723 = vld [vmem:[%s1718 + $0x20] sm:$0xff]
        %v1724 = vld [vmem:[%s1718 + $0x28] sm:$0xff]
        %v1725 = vld [vmem:[%s1718 + $0x30] sm:$0xff]
        %v1726 = vld [vmem:[%s1718 + $0x38] sm:$0xff]
        %v1727 = vld [vmem:[%s1718 + $0x40] sm:$0xff]
        %v1728 = vld [vmem:[%s1718 + $0x48] sm:$0xff]
        %v1729 = vld [vmem:[%s1718 + $0x50] sm:$0xff]
        %v1730 = vld [vmem:[%s1718 + $0x58] sm:$0xff]
        %v1731 = vld [vmem:[%s1718 + $0x60] sm:$0xff]
        %v1732 = vld [vmem:[%s1718 + $0x68] sm:$0xff]
        %v1733 = vld [vmem:[%s1718 + $0x70] sm:$0xff]
        %v1734 = vld [vmem:[%s1718 + $0x78] sm:$0xff]
        %1735 = vmatprep.subr.mxu0 0.0
        %1736 = vmatpush1.msra.mxu0 %v1719
        %1737 = vmatprep.subr.mxu0 0.0
        %1738 = vmatpush1.msra.mxu0 %v1720
        %1739 = vmatprep.subr.mxu0 0.0
        %1740 = vmatpush1.msra.mxu0 %v1721
        %1741 = vmatprep.subr.mxu0 0.0
        %1742 = vmatpush1.msra.mxu0 %v1722
        %1743 = vmatprep.subr.mxu0 0.0
        %1744 = vmatpush1.msra.mxu0 %v1723
        %1745 = vmatprep.subr.mxu0 0.0
        %1746 = vmatpush1.msra.mxu0 %v1724
        %1747 = vmatprep.subr.mxu0 0.0
        %1748 = vmatpush1.msra.mxu0 %v1725
        %1749 = vmatprep.subr.mxu0 0.0
        %1750 = vmatpush1.msra.mxu0 %v1726
        %1751 = vmatprep.subr.mxu0 0.0
        %1752 = vmatpush1.msra.mxu0 %v1727
        %1753 = vmatprep.subr.mxu0 0.0
        %1754 = vmatpush1.msra.mxu0 %v1728
        %1755 = vmatprep.subr.mxu0 0.0
        %1756 = vmatpush1.msra.mxu0 %v1729
        %1757 = vmatprep.subr.mxu0 0.0
        %1758 = vmatpush1.msra.mxu0 %v1730
        %1759 = vmatprep.subr.mxu0 0.0
        %1760 = vmatpush1.msra.mxu0 %v1731
        %1761 = vmatprep.subr.mxu0 0.0
        %1762 = vmatpush1.msra.mxu0 %v1732
        %1763 = vmatprep.subr.mxu0 0.0
        %1764 = vmatpush1.msra.mxu0 %v1733
        %1765 = vmatprep.subr.mxu0 0.0
        %1766 = vmatpush1.msra.mxu0 %v1734
        %1767 = vmatprep.subr.mxu0 0.0
        %1768 = vmatpush1.msra.mxu0 0.0
        %1769 = vmatprep.subr.mxu0 0.0
        %1770 = vmatpush1.msra.mxu0 0.0
        %1771 = vmatprep.subr.mxu0 0.0
        %1772 = vmatpush1.msra.mxu0 0.0
        %1773 = vmatprep.subr.mxu0 0.0
        %1774 = vmatpush1.msra.mxu0 0.0
        %1775 = vmatprep.subr.mxu0 0.0
        %1776 = vmatpush1.msra.mxu0 0.0
        %1777 = vmatprep.subr.mxu0 0.0
        %1778 = vmatpush1.msra.mxu0 0.0
        %1779 = vmatprep.subr.mxu0 0.0
        %1780 = vmatpush1.msra.mxu0 0.0
        %1781 = vmatprep.subr.mxu0 0.0
        %1782 = vmatpush1.msra.mxu0 0.0
        %1783 = vmatprep.subr.mxu0 0.0
        %1784 = vmatpush1.msra.mxu0 0.0
        %1785 = vmatprep.subr.mxu0 0.0
        %1786 = vmatpush1.msra.mxu0 0.0
        %1787 = vmatprep.subr.mxu0 0.0
        %1788 = vmatpush1.msra.mxu0 0.0
        %1789 = vmatprep.subr.mxu0 0.0
        %1790 = vmatpush1.msra.mxu0 0.0
        %1791 = vmatprep.subr.mxu0 0.0
        %1792 = vmatpush1.msra.mxu0 0.0
        %1793 = vmatprep.subr.mxu0 0.0
        %1794 = vmatpush1.msra.mxu0 0.0
        %1795 = vmatprep.subr.mxu0 0.0
        %1796 = vmatpush1.msra.mxu0 0.0
        %1797 = vmatprep.subr.mxu0 0.0
        %1798 = vmatpush1.msra.mxu0 0.0
        %1799 = vmatprep.mubr.f32.mxu0 0.0
        %1800 = vmatmul.mubr.f32.gmra.mrb[0].mxu0 %v1527
        %v1801 = vpop.f32.mrb[0].mxu0
        %v1802 = vadd.f32 0.0, %v1801
        %v1803 = vpop.f32.mrb[0].mxu0
        %1804 = vmatprep.mubr.f32.mxu0 0.0
        %1805 = vmatmul.mubr.f32.gmra.mrb[0].mxu0 %v1532
        %v1806 = vpop.f32.mrb[0].mxu0
        %v1807 = vadd.f32 0.0, %v1806
        %v1808 = vpop.f32.mrb[0].mxu0
        %1809 = vdwg.mxu0
        %v1810 = vadd.f32 %v1710, %v1802
        %v1811 = vadd.f32 %v1715, %v1807
        %v1812 = vld [vmem:[%s8] sm:$0x1]
        %v1814 = vlaneseq
        %v1815 = vshrl.u32 %v1814, 7
        %v1816 = vsub.s32 0, %v1815
        %v1817 = vrot.slane %v1812, %v1816
        %v1819 = vadd.f32 %v1810, %v1817
        %v1820 = vadd.f32 %v1811, %v1817
        %v1821 = vmax.f32 %v1819, 0.0
        %v1822 = vmax.f32 %v1820, 0.0
        %1823 = vst [vmem:[%s407] sm:$0xff] %v1821
        %1824 = vst [vmem:[%s407 + $0x8] sm:$0xff] %v1822
        %s1825 = sand.u32 %s235, 1
        %s1826 = scalar_lea.sflag [#allocation4], %s1825
        %s1827 = sand.u32 %s235, 1
        %s1828 = smul.addr %s1827, 16
        %s1829 = scalar_lea.vmem [#allocation10], %s1828
        // Predicated region
        $region73: #{tpu_custom_call.1} parent=55 // pred_check
          %p1830 = pneg %p245
        $region74: #{tpu_custom_call.1} parent=55 // pred_check_branch
          %1832 = sbr.rel (%p1830) target = $region76
        $region75: #{tpu_custom_call.1} parent=55 // pred_region
          %s1833 = smul.u32 2, %s28
          %s1835 = ssub.s32 256, 256
          %1836 = vsyncadd %s1826, %s1835
          %s1837 = smul.addr %s1833, 128
          %s1838 = scalar_lea.hbm %s9, %s1837
          %s1839 = sshll.u32 %s1829, 4
          %s1840 = int_to_ptr.vmem [resolvable:$true] %s1839
          %1845 = dma.vmem_to_hbm [thread:$0]  %s1840, 256, %s1838, %s1826, 128, 128, 8
        $region76: #{tpu_custom_call.1} parent=55 // pred_fallthru
          _
      $region56: #{tpu_custom_call.1} parent=5 // pred_fallthru
        _
      %p1846 = scmp.le.s32.totalorder 2, %s23
      // Predicated region
      $region77: #{tpu_custom_call.1} parent=5 // pred_check
        %p1847 = pneg %p1846
      $region78: #{tpu_custom_call.1} parent=5 // pred_check_branch
        %1849 = sbr.rel (%p1847) target = $region80
      $region79: #{tpu_custom_call.1} parent=5 // pred_region
        %s1850 = ssub.s32 %s23, 2
        // Predicated region
        $region81: #{tpu_custom_call.1} parent=79 // pred_check
          %p1851 = pneg %p251
        $region82: #{tpu_custom_call.1} parent=79 // pred_check_branch
          %1853 = sbr.rel (%p1851) target = $region84
        $region83: #{tpu_custom_call.1} parent=79 // pred_region
          %s1854 = sand.u32 %s236, 1
          %s1855 = scalar_lea.sflag [#allocation4], %s1854
          %s1856 = sand.u32 %s236, 1
          %s1857 = smul.addr %s1856, 16
          %s1858 = scalar_lea.vmem [#allocation10], %s1857
          %1859 = dma.done %s1855, 256
        $region84: #{tpu_custom_call.1} parent=79 // pred_fallthru
          _
      $region80: #{tpu_custom_call.1} parent=5 // pred_fallthru
        _
    $region6: #{tpu_custom_call.1} parent=1 // loop_footer
      %s27 = sadd.s32 1, %s23
    $region7: #{tpu_custom_call.1} parent=1 // loop_footer_branch
      %22 = sbr.rel target = $region3
    $region8: #{tpu_custom_call.1} parent=1 // loop_exit
      _
    %1860 = vsyncpa [#allocation3], 1
    %s1861 = scalar_lea.sflag [#allocation3], 1
    %1862 = vsyncpa %s1861, 1
    %1863 = vsyncpa [#allocation6], 1
    %1864 = vsyncpa [#allocation9], 1
    %1865 = vsyncpa [#allocation4], 1
    %s1866 = scalar_lea.sflag [#allocation4], 1
    %1867 = vsyncpa %s1866, 1

</llo_original>
